<compile_context>
chip_gen: v7x
topology: tpu7x:2x2x1
jax: 0.10.0
libtpu: 0.0.40
codegen_flags: <defaults>
</compile_context>

<pallas_src>
import functools

import jax
import jax.numpy as jnp
from jax.experimental import pallas as pl
from jax.experimental.pallas import tpu as pltpu

INPUT_SIZE = 784
HIDDEN_SIZE = 100
NUM_CLASSES = 10

# Lane-dense padded sizes (multiples of 128 -> unmasked vregs / stores).
HIDDEN_PAD = 128
CLASSES_PAD = 128


def _round_up(x, m):
    return (x + m - 1) // m * m


def mlp_kernel(x_ref, w1_ref, b1_ref, w2_ref, b2_ref, o_ref):
    # linear1: (bm, 784) @ (784, 128), f32 accumulation on the MXU.
    h = jnp.dot(x_ref[...], w1_ref[...], preferred_element_type=jnp.float32)
    h = h + b1_ref[...]          # bias broadcast, f32 on the VPU
    h = jnp.maximum(h, 0.0)      # ReLU, f32
    # linear2: (bm, 128) @ (128, 128); feed the MXU in the weight dtype
    # (no-op for f32, bf16 cast for the bf16 path), accumulate in f32.
    out = jnp.dot(h.astype(w2_ref.dtype), w2_ref[...],
                  preferred_element_type=jnp.float32)
    out = out + b2_ref[...]
    o_ref[...] = out.astype(o_ref.dtype)


@functools.partial(jax.jit, static_argnames=("block_m",))
def neural_net_forward(x, w1, b1, w2, b2, *, block_m=1024):
    """relu(x @ w1 + b1) @ w2 + b2 with padded params from prepare_params.

    x: (B, 784) f32 or bf16.  Returns (B, NUM_CLASSES) float32.
    """
    B, D = x.shape
    H = w1.shape[1]       # HIDDEN_PAD
    C = w2.shape[1]       # CLASSES_PAD

    # Batch tile: as large as requested, but never larger than the batch,
    # and always a multiple of 8 (sublane constraint).  Pad the batch so the
    # grid divides evenly; padded rows are zeros and get sliced off below.
    bm = min(block_m, _round_up(B, 8))
    B_pad = _round_up(B, bm)
    if B_pad != B:
        x = jnp.pad(x, ((0, B_pad - B), (0, 0)))

    grid = (B_pad // bm,)

    cost = pl.CostEstimate(
        flops=2 * B_pad * (D * H + H * C),
        transcendentals=0,
        bytes_accessed=(B_pad * D * x.dtype.itemsize
                        + (D * H + H * C) * w1.dtype.itemsize
                        + (H + C) * 4
                        + B_pad * C * 4),
    )

    out = pl.pallas_call(
        mlp_kernel,
        out_shape=jax.ShapeDtypeStruct((B_pad, C), jnp.float32),
        grid_spec=pltpu.PrefetchScalarGridSpec(
            num_scalar_prefetch=0,
            grid=grid,
            in_specs=[
                pl.BlockSpec((bm, D), lambda i: (i, 0)),   # x tile (streamed)
                pl.BlockSpec((D, H), lambda i: (0, 0)),    # w1 (resident)
                pl.BlockSpec((1, H), lambda i: (0, 0)),    # b1 (resident, f32)
                pl.BlockSpec((H, C), lambda i: (0, 0)),    # w2 (resident)
                pl.BlockSpec((1, C), lambda i: (0, 0)),    # b2 (resident, f32)
            ],
            out_specs=pl.BlockSpec((bm, C), lambda i: (i, 0)),
        ),
        compiler_params=pltpu.CompilerParams(
            dimension_semantics=("parallel",),   # batch axis shards across TCs
        ),
        cost_estimate=cost,
    )(x, w1, b1, w2, b2)

    return out[:B, :NUM_CLASSES]


def init_params(key):
    """nn.Linear-style init (uniform +/- 1/sqrt(fan_in)), PyTorch layout:
    W of shape (out_features, in_features), b of shape (out_features,)."""
    k1, k2, k3, k4 = jax.random.split(key, 4)
    bound1 = 1.0 / jnp.sqrt(INPUT_SIZE)
    bound2 = 1.0 / jnp.sqrt(HIDDEN_SIZE)
    w1 = jax.random.uniform(k1, (HIDDEN_SIZE, INPUT_SIZE), jnp.float32,
                            -bound1, bound1)
    b1 = jax.random.uniform(k2, (HIDDEN_SIZE,), jnp.float32, -bound1, bound1)
    w2 = jax.random.uniform(k3, (NUM_CLASSES, HIDDEN_SIZE), jnp.float32,
                            -bound2, bound2)
    b2 = jax.random.uniform(k4, (NUM_CLASSES,), jnp.float32, -bound2, bound2)
    return w1, b1, w2, b2


def prepare_params(w1, b1, w2, b2, *, dtype=jnp.float32):
    """One-time host-side prep: transpose to (in, out), zero-pad hidden
    100->128 and classes 10->128 (zero pads contribute nothing through
    ReLU/matmul), cast weights to the compute dtype.  Biases stay f32 since
    the bias-add / ReLU path runs in f32 vregs."""
    w1t = jnp.zeros((INPUT_SIZE, HIDDEN_PAD), jnp.float32)
    w1t = w1t.at[:, :HIDDEN_SIZE].set(w1.T)
    b1p = jnp.zeros((1, HIDDEN_PAD), jnp.float32).at[0, :HIDDEN_SIZE].set(b1)
    w2t = jnp.zeros((HIDDEN_PAD, CLASSES_PAD), jnp.float32)
    w2t = w2t.at[:HIDDEN_SIZE, :NUM_CLASSES].set(w2.T)
    b2p = jnp.zeros((1, CLASSES_PAD), jnp.float32).at[0, :NUM_CLASSES].set(b2)
    return w1t.astype(dtype), b1p, w2t.astype(dtype), b2p


if __name__ == "__main__":
    key = jax.random.PRNGKey(0)
    kx, kp = jax.random.split(key)

    batch = 256
    x = jax.random.normal(kx, (batch, INPUT_SIZE), jnp.float32)
    w1, b1, w2, b2 = init_params(kp)

    # Pure-JAX reference, PyTorch convention: x @ W.T + b.
    ref = jnp.maximum(x @ w1.T + b1, 0.0) @ w2.T + b2

    # f32 path.
    p32 = prepare_params(w1, b1, w2, b2, dtype=jnp.float32)
    out_f32 = jax.block_until_ready(neural_net_forward(x, *p32))
    assert out_f32.shape == (batch, NUM_CLASSES)
    assert jnp.allclose(out_f32, ref, atol=1e-4, rtol=1e-4)

    # bf16 path (halves HBM traffic / doubles MXU rate on v6e/v7x);
    # accumulation stays f32 so tolerance is loose but small.
    pbf = prepare_params(w1, b1, w2, b2, dtype=jnp.bfloat16)
    out_bf16 = jax.block_until_ready(
        neural_net_forward(x.astype(jnp.bfloat16), *pbf))
    assert out_bf16.shape == (batch, NUM_CLASSES)
    assert jnp.allclose(out_bf16, ref, atol=5e-2, rtol=5e-2)

    print("KERNEL_OK")
</pallas_src>

<mosaic_0001>
module attributes {stable_mosaic.version = 11 : i64} {
  func.func @mlp_kernel(%arg0: i32, %arg1: memref<256x784xf32, #tpu.memory_space<vmem>>, %arg2: memref<784x128xf32, #tpu.memory_space<vmem>>, %arg3: memref<1x128xf32, #tpu.memory_space<vmem>>, %arg4: memref<128x128xf32, #tpu.memory_space<vmem>>, %arg5: memref<1x128xf32, #tpu.memory_space<vmem>>, %arg6: memref<256x128xf32, #tpu.memory_space<vmem>>) attributes {dimension_semantics = [#tpu.dimension_semantics<parallel>], iteration_bounds = array<i64: 1>, scalar_prefetch = 0 : i64, scratch_operands = 0 : i64, tpu.core_type = #tpu.core_type<tc>, window_params = [{transform_indices = @transform_0, window_bounds = array<i64: 256, 784>}, {pipeline_mode = #tpu.pipeline_mode<synchronous>, transform_indices = @transform_1, window_bounds = array<i64: 784, 128>}, {pipeline_mode = #tpu.pipeline_mode<synchronous>, transform_indices = @transform_2, window_bounds = array<i64: 1, 128>}, {pipeline_mode = #tpu.pipeline_mode<synchronous>, transform_indices = @transform_3, window_bounds = array<i64: 128, 128>}, {pipeline_mode = #tpu.pipeline_mode<synchronous>, transform_indices = @transform_4, window_bounds = array<i64: 1, 128>}, {transform_indices = @transform_5, window_bounds = array<i64: 256, 128>}]} {
    %c0 = arith.constant 0 : index
    %c0_0 = arith.constant 0 : index
    %0 = vector.load %arg1[%c0, %c0_0] : memref<256x784xf32, #tpu.memory_space<vmem>>, vector<256x784xf32>
    %c0_1 = arith.constant 0 : index
    %c0_2 = arith.constant 0 : index
    %1 = vector.load %arg2[%c0_1, %c0_2] : memref<784x128xf32, #tpu.memory_space<vmem>>, vector<784x128xf32>
    %cst = arith.constant dense<0.000000e+00> : vector<256x128xf32>
    %2 = tpu.matmul %0, %1, %cst {dimension_numbers = #tpu.dot_dimension_numbers<[1], [0], [0], [1], [0, 0, 1, 1], [], []>} : vector<256x784xf32>, vector<784x128xf32>, vector<256x128xf32> -> vector<256x128xf32>
    %c0_3 = arith.constant 0 : index
    %c0_4 = arith.constant 0 : index
    %3 = vector.load %arg3[%c0_3, %c0_4] : memref<1x128xf32, #tpu.memory_space<vmem>>, vector<1x128xf32>
    %4 = vector.broadcast %3 : vector<1x128xf32> to vector<256x128xf32>
    %5 = arith.addf %2, %4 : vector<256x128xf32>
    %cst_5 = arith.constant 0.000000e+00 : f32
    %6 = vector.broadcast %cst_5 : f32 to vector<256x128xf32>
    %7 = arith.maximumf %5, %6 : vector<256x128xf32>
    %c0_6 = arith.constant 0 : index
    %c0_7 = arith.constant 0 : index
    %8 = vector.load %arg4[%c0_6, %c0_7] : memref<128x128xf32, #tpu.memory_space<vmem>>, vector<128x128xf32>
    %cst_8 = arith.constant dense<0.000000e+00> : vector<256x128xf32>
    %9 = tpu.matmul %7, %8, %cst_8 {dimension_numbers = #tpu.dot_dimension_numbers<[1], [0], [0], [1], [0, 0, 1, 1], [], []>} : vector<256x128xf32>, vector<128x128xf32>, vector<256x128xf32> -> vector<256x128xf32>
    %c0_9 = arith.constant 0 : index
    %c0_10 = arith.constant 0 : index
    %10 = vector.load %arg5[%c0_9, %c0_10] : memref<1x128xf32, #tpu.memory_space<vmem>>, vector<1x128xf32>
    %11 = vector.broadcast %10 : vector<1x128xf32> to vector<256x128xf32>
    %12 = arith.addf %9, %11 : vector<256x128xf32>
    %c0_11 = arith.constant 0 : index
    %c0_12 = arith.constant 0 : index
    %13 = vector.load %arg6[%c0_11, %c0_12] : memref<256x128xf32, #tpu.memory_space<vmem>>, vector<256x128xf32>
    tpu.vector_store %arg6[%c0_11, %c0_12], %12 {strides = array<i32>} : memref<256x128xf32, #tpu.memory_space<vmem>>, vector<256x128xf32>,
    return
  }
  func.func @transform_0(%arg0: i32) -> (i32, i32) {
    %c0_i32 = arith.constant 0 : i32
    %c0_i32_0 = arith.constant 0 : i32
    return %arg0, %c0_i32 : i32, i32
  }
  func.func @transform_1(%arg0: i32) -> (i32, i32) {
    %c0_i32 = arith.constant 0 : i32
    %c0_i32_0 = arith.constant 0 : i32
    %c0_i32_1 = arith.constant 0 : i32
    return %c0_i32, %c0_i32_0 : i32, i32
  }
  func.func @transform_2(%arg0: i32) -> (i32, i32) {
    %c0_i32 = arith.constant 0 : i32
    %c0_i32_0 = arith.constant 0 : i32
    %c0_i32_1 = arith.constant 0 : i32
    return %c0_i32, %c0_i32_0 : i32, i32
  }
  func.func @transform_3(%arg0: i32) -> (i32, i32) {
    %c0_i32 = arith.constant 0 : i32
    %c0_i32_0 = arith.constant 0 : i32
    %c0_i32_1 = arith.constant 0 : i32
    return %c0_i32, %c0_i32_0 : i32, i32
  }
  func.func @transform_4(%arg0: i32) -> (i32, i32) {
    %c0_i32 = arith.constant 0 : i32
    %c0_i32_0 = arith.constant 0 : i32
    %c0_i32_1 = arith.constant 0 : i32
    return %c0_i32, %c0_i32_0 : i32, i32
  }
  func.func @transform_5(%arg0: i32) -> (i32, i32) {
    %c0_i32 = arith.constant 0 : i32
    %c0_i32_0 = arith.constant 0 : i32
    return %arg0, %c0_i32 : i32, i32
  }
}

</mosaic_0001>

<llo_original>
// kernel: neural_net_forward.1
$region0: #{neural_net_forward.1}
  #allocation0 [shape = 'u32[]', space=smem, size = 0x4, offset = 0x4, fixed_abs, tag = 'smem constant byte address 0x4 - core index']
  #allocation1 [shape = 'u32[144,128]{1,0:T(1,128)}', space=vmem, size = 0x12000, scoped, tag = 'internal scratch']
  %s0 = inlined_call_operand.vmem [shape: f32[256,784], index: 0, kind: input, shape index: {}]
  %s1 = inlined_call_operand.vmem [shape: f32[784,128], index: 1, kind: input, shape index: {}]
  %s2 = inlined_call_operand.vmem [shape: f32[1,128], index: 2, kind: input, shape index: {}]
  %s3 = inlined_call_operand.vmem [shape: f32[128,128], index: 3, kind: input, shape index: {}]
  %s4 = inlined_call_operand.vmem [shape: f32[1,128], index: 4, kind: input, shape index: {}]
  %s5 = inlined_call_operand.vmem [shape: f32[256,128], index: 5, kind: output, shape index: {}]
  %s6 = sld [smem:[#allocation0]]
  $region30: #{neural_net_forward.1} parent=0
    _
  %s8 = ssub.s32 1, %s6
  %s9 = scalar_select 0, %s8, %s6
  // Predicated region
  $region2: #{neural_net_forward.1} parent=0 // pred_check
    _
  $region3: #{neural_net_forward.1} parent=0 // pred_check_branch
    %11 = sbr.rel (0) target = $region5
  $region4: #{neural_net_forward.1} parent=0 // pred_region
    _
  $region5: #{neural_net_forward.1} parent=0 // pred_fallthru
    _
  // Predicated region
  $region6: #{neural_net_forward.1} parent=0 // pred_check
    _
  $region7: #{neural_net_forward.1} parent=0 // pred_check_branch
    %13 = sbr.rel (0) target = $region9
  $region8: #{neural_net_forward.1} parent=0 // pred_region
    _
  $region9: #{neural_net_forward.1} parent=0 // pred_fallthru
    _
  // Predicated region
  $region10: #{neural_net_forward.1} parent=0 // pred_check
    _
  $region11: #{neural_net_forward.1} parent=0 // pred_check_branch
    %15 = sbr.rel (0) target = $region13
  $region12: #{neural_net_forward.1} parent=0 // pred_region
    _
  $region13: #{neural_net_forward.1} parent=0 // pred_fallthru
    _
  // Predicated region
  $region14: #{neural_net_forward.1} parent=0 // pred_check
    _
  $region15: #{neural_net_forward.1} parent=0 // pred_check_branch
    %17 = sbr.rel (0) target = $region17
  $region16: #{neural_net_forward.1} parent=0 // pred_region
    _
  $region17: #{neural_net_forward.1} parent=0 // pred_fallthru
    _
  // Predicated region
  $region18: #{neural_net_forward.1} parent=0 // pred_check
    _
  $region19: #{neural_net_forward.1} parent=0 // pred_check_branch
    %19 = sbr.rel (0) target = $region21
  $region20: #{neural_net_forward.1} parent=0 // pred_region
    _
  $region21: #{neural_net_forward.1} parent=0 // pred_fallthru
    _
  %v20 = vld [vmem:[%s0] sm:$0xff]
  %v21 = vld [vmem:[%s0 + $0x8] sm:$0xff]
  %v22 = vld [vmem:[%s0 + $0x10] sm:$0xff]
  %v23 = vld [vmem:[%s0 + $0x18] sm:$0xff]
  %v24 = vld [vmem:[%s0 + $0x20] sm:$0xff]
  %v25 = vld [vmem:[%s0 + $0x28] sm:$0xff]
  %v26 = vld [vmem:[%s0 + $0x30] sm:$0xff]
  %v27 = vld [vmem:[%s0 + $0x38] sm:$0xff]
  %v28 = vld [vmem:[%s0 + $0x40] sm:$0xff]
  %v29 = vld [vmem:[%s0 + $0x48] sm:$0xff]
  %v30 = vld [vmem:[%s0 + $0x50] sm:$0xff]
  %v31 = vld [vmem:[%s0 + $0x58] sm:$0xff]
  %v32 = vld [vmem:[%s0 + $0x60] sm:$0xff]
  %v33 = vld [vmem:[%s0 + $0x68] sm:$0xff]
  %v34 = vld [vmem:[%s0 + $0x70] sm:$0xff]
  %v35 = vld [vmem:[%s0 + $0x78] sm:$0xff]
  %v36 = vld [vmem:[%s0 + $0x80] sm:$0xff]
  %v37 = vld [vmem:[%s0 + $0x88] sm:$0xff]
  %v38 = vld [vmem:[%s0 + $0x90] sm:$0xff]
  %v39 = vld [vmem:[%s0 + $0x98] sm:$0xff]
  %v40 = vld [vmem:[%s0 + $0xa0] sm:$0xff]
  %v41 = vld [vmem:[%s0 + $0xa8] sm:$0xff]
  %v42 = vld [vmem:[%s0 + $0xb0] sm:$0xff]
  %v43 = vld [vmem:[%s0 + $0xb8] sm:$0xff]
  %v44 = vld [vmem:[%s0 + $0xc0] sm:$0xff]
  %v45 = vld [vmem:[%s0 + $0xc8] sm:$0xff]
  %v46 = vld [vmem:[%s0 + $0xd0] sm:$0xff]
  %v47 = vld [vmem:[%s0 + $0xd8] sm:$0xff]
  %v48 = vld [vmem:[%s0 + $0xe0] sm:$0xff]
  %v49 = vld [vmem:[%s0 + $0xe8] sm:$0xff]
  %v50 = vld [vmem:[%s0 + $0xf0] sm:$0xff]
  %v51 = vld [vmem:[%s0 + $0xf8] sm:$0xff]
  %v52 = vld [vmem:[%s0 + $0x100] sm:$0xff]
  %v53 = vld [vmem:[%s0 + $0x108] sm:$0xff]
  %v54 = vld [vmem:[%s0 + $0x110] sm:$0xff]
  %v55 = vld [vmem:[%s0 + $0x118] sm:$0xff]
  %v56 = vld [vmem:[%s0 + $0x120] sm:$0xff]
  %v57 = vld [vmem:[%s0 + $0x128] sm:$0xff]
  %v58 = vld [vmem:[%s0 + $0x130] sm:$0xff]
  %v59 = vld [vmem:[%s0 + $0x138] sm:$0xff]
  %v60 = vld [vmem:[%s0 + $0x140] sm:$0xff]
  %v61 = vld [vmem:[%s0 + $0x148] sm:$0xff]
  %v62 = vld [vmem:[%s0 + $0x150] sm:$0xff]
  %v63 = vld [vmem:[%s0 + $0x158] sm:$0xff]
  %v64 = vld [vmem:[%s0 + $0x160] sm:$0xff]
  %v65 = vld [vmem:[%s0 + $0x168] sm:$0xff]
  %v66 = vld [vmem:[%s0 + $0x170] sm:$0xff]
  %v67 = vld [vmem:[%s0 + $0x178] sm:$0xff]
  %v68 = vld [vmem:[%s0 + $0x180] sm:$0xff]
  %v69 = vld [vmem:[%s0 + $0x188] sm:$0xff]
  %v70 = vld [vmem:[%s0 + $0x190] sm:$0xff]
  %v71 = vld [vmem:[%s0 + $0x198] sm:$0xff]
  %v72 = vld [vmem:[%s0 + $0x1a0] sm:$0xff]
  %v73 = vld [vmem:[%s0 + $0x1a8] sm:$0xff]
  %v74 = vld [vmem:[%s0 + $0x1b0] sm:$0xff]
  %v75 = vld [vmem:[%s0 + $0x1b8] sm:$0xff]
  %v76 = vld [vmem:[%s0 + $0x1c0] sm:$0xff]
  %v77 = vld [vmem:[%s0 + $0x1c8] sm:$0xff]
  %v78 = vld [vmem:[%s0 + $0x1d0] sm:$0xff]
  %v79 = vld [vmem:[%s0 + $0x1d8] sm:$0xff]
  %v80 = vld [vmem:[%s0 + $0x1e0] sm:$0xff]
  %v81 = vld [vmem:[%s0 + $0x1e8] sm:$0xff]
  %v82 = vld [vmem:[%s0 + $0x1f0] sm:$0xff]
  %v83 = vld [vmem:[%s0 + $0x1f8] sm:$0xff]
  %v84 = vld [vmem:[%s0 + $0x200] sm:$0xff]
  %v85 = vld [vmem:[%s0 + $0x208] sm:$0xff]
  %v86 = vld [vmem:[%s0 + $0x210] sm:$0xff]
  %v87 = vld [vmem:[%s0 + $0x218] sm:$0xff]
  %v88 = vld [vmem:[%s0 + $0x220] sm:$0xff]
  %v89 = vld [vmem:[%s0 + $0x228] sm:$0xff]
  %v90 = vld [vmem:[%s0 + $0x230] sm:$0xff]
  %v91 = vld [vmem:[%s0 + $0x238] sm:$0xff]
  %v92 = vld [vmem:[%s0 + $0x240] sm:$0xff]
  %v93 = vld [vmem:[%s0 + $0x248] sm:$0xff]
  %v94 = vld [vmem:[%s0 + $0x250] sm:$0xff]
  %v95 = vld [vmem:[%s0 + $0x258] sm:$0xff]
  %v96 = vld [vmem:[%s0 + $0x260] sm:$0xff]
  %v97 = vld [vmem:[%s0 + $0x268] sm:$0xff]
  %v98 = vld [vmem:[%s0 + $0x270] sm:$0xff]
  %v99 = vld [vmem:[%s0 + $0x278] sm:$0xff]
  %v100 = vld [vmem:[%s0 + $0x280] sm:$0xff]
  %v101 = vld [vmem:[%s0 + $0x288] sm:$0xff]
  %v102 = vld [vmem:[%s0 + $0x290] sm:$0xff]
  %v103 = vld [vmem:[%s0 + $0x298] sm:$0xff]
  %v104 = vld [vmem:[%s0 + $0x2a0] sm:$0xff]
  %v105 = vld [vmem:[%s0 + $0x2a8] sm:$0xff]
  %v106 = vld [vmem:[%s0 + $0x2b0] sm:$0xff]
  %v107 = vld [vmem:[%s0 + $0x2b8] sm:$0xff]
  %v108 = vld [vmem:[%s0 + $0x2c0] sm:$0xff]
  %v109 = vld [vmem:[%s0 + $0x2c8] sm:$0xff]
  %v110 = vld [vmem:[%s0 + $0x2d0] sm:$0xff]
  %v111 = vld [vmem:[%s0 + $0x2d8] sm:$0xff]
  %v112 = vld [vmem:[%s0 + $0x2e0] sm:$0xff]
  %v113 = vld [vmem:[%s0 + $0x2e8] sm:$0xff]
  %v114 = vld [vmem:[%s0 + $0x2f0] sm:$0xff]
  %v115 = vld [vmem:[%s0 + $0x2f8] sm:$0xff]
  %v116 = vld [vmem:[%s0 + $0x300] sm:$0xff]
  %v117 = vld [vmem:[%s0 + $0x308] sm:$0xff]
  %v118 = vld [vmem:[%s0 + $0x310] sm:$0xff]
  %v119 = vld [vmem:[%s0 + $0x318] sm:$0xff]
  %v120 = vld [vmem:[%s0 + $0x320] sm:$0xff]
  %v121 = vld [vmem:[%s0 + $0x328] sm:$0xff]
  %v122 = vld [vmem:[%s0 + $0x330] sm:$0xff]
  %v123 = vld [vmem:[%s0 + $0x338] sm:$0xff]
  %v124 = vld [vmem:[%s0 + $0x340] sm:$0xff]
  %v125 = vld [vmem:[%s0 + $0x348] sm:$0xff]
  %v126 = vld [vmem:[%s0 + $0x350] sm:$0xff]
  %v127 = vld [vmem:[%s0 + $0x358] sm:$0xff]
  %v128 = vld [vmem:[%s0 + $0x360] sm:$0xff]
  %v129 = vld [vmem:[%s0 + $0x368] sm:$0xff]
  %v130 = vld [vmem:[%s0 + $0x370] sm:$0xff]
  %v131 = vld [vmem:[%s0 + $0x378] sm:$0xff]
  %v132 = vld [vmem:[%s0 + $0x380] sm:$0xff]
  %v133 = vld [vmem:[%s0 + $0x388] sm:$0xff]
  %v134 = vld [vmem:[%s0 + $0x390] sm:$0xff]
  %v135 = vld [vmem:[%s0 + $0x398] sm:$0xff]
  %v136 = vld [vmem:[%s0 + $0x3a0] sm:$0xff]
  %v137 = vld [vmem:[%s0 + $0x3a8] sm:$0xff]
  %v138 = vld [vmem:[%s0 + $0x3b0] sm:$0xff]
  %v139 = vld [vmem:[%s0 + $0x3b8] sm:$0xff]
  %v140 = vld [vmem:[%s0 + $0x3c0] sm:$0xff]
  %v141 = vld [vmem:[%s0 + $0x3c8] sm:$0xff]
  %v142 = vld [vmem:[%s0 + $0x3d0] sm:$0xff]
  %v143 = vld [vmem:[%s0 + $0x3d8] sm:$0xff]
  %v144 = vld [vmem:[%s0 + $0x3e0] sm:$0xff]
  %v145 = vld [vmem:[%s0 + $0x3e8] sm:$0xff]
  %v146 = vld [vmem:[%s0 + $0x3f0] sm:$0xff]
  %v147 = vld [vmem:[%s0 + $0x3f8] sm:$0xff]
  %v148 = vld [vmem:[%s0 + $0x400] sm:$0xff]
  %v149 = vld [vmem:[%s0 + $0x408] sm:$0xff]
  %v150 = vld [vmem:[%s0 + $0x410] sm:$0xff]
  %v151 = vld [vmem:[%s0 + $0x418] sm:$0xff]
  %v152 = vld [vmem:[%s0 + $0x420] sm:$0xff]
  %v153 = vld [vmem:[%s0 + $0x428] sm:$0xff]
  %v154 = vld [vmem:[%s0 + $0x430] sm:$0xff]
  %v155 = vld [vmem:[%s0 + $0x438] sm:$0xff]
  %v156 = vld [vmem:[%s0 + $0x440] sm:$0xff]
  %v157 = vld [vmem:[%s0 + $0x448] sm:$0xff]
  %v158 = vld [vmem:[%s0 + $0x450] sm:$0xff]
  %v159 = vld [vmem:[%s0 + $0x458] sm:$0xff]
  %v160 = vld [vmem:[%s0 + $0x460] sm:$0xff]
  %v161 = vld [vmem:[%s0 + $0x468] sm:$0xff]
  %v162 = vld [vmem:[%s0 + $0x470] sm:$0xff]
  %v163 = vld [vmem:[%s0 + $0x478] sm:$0xff]
  %v164 = vld [vmem:[%s0 + $0x480] sm:$0xff]
  %v165 = vld [vmem:[%s0 + $0x488] sm:$0xff]
  %v166 = vld [vmem:[%s0 + $0x490] sm:$0xff]
  %v167 = vld [vmem:[%s0 + $0x498] sm:$0xff]
  %v168 = vld [vmem:[%s0 + $0x4a0] sm:$0xff]
  %v169 = vld [vmem:[%s0 + $0x4a8] sm:$0xff]
  %v170 = vld [vmem:[%s0 + $0x4b0] sm:$0xff]
  %v171 = vld [vmem:[%s0 + $0x4b8] sm:$0xff]
  %v172 = vld [vmem:[%s0 + $0x4c0] sm:$0xff]
  %v173 = vld [vmem:[%s0 + $0x4c8] sm:$0xff]
  %v174 = vld [vmem:[%s0 + $0x4d0] sm:$0xff]
  %v175 = vld [vmem:[%s0 + $0x4d8] sm:$0xff]
  %v176 = vld [vmem:[%s0 + $0x4e0] sm:$0xff]
  %v177 = vld [vmem:[%s0 + $0x4e8] sm:$0xff]
  %v178 = vld [vmem:[%s0 + $0x4f0] sm:$0xff]
  %v179 = vld [vmem:[%s0 + $0x4f8] sm:$0xff]
  %v180 = vld [vmem:[%s0 + $0x500] sm:$0xff]
  %v181 = vld [vmem:[%s0 + $0x508] sm:$0xff]
  %v182 = vld [vmem:[%s0 + $0x510] sm:$0xff]
  %v183 = vld [vmem:[%s0 + $0x518] sm:$0xff]
  %v184 = vld [vmem:[%s0 + $0x520] sm:$0xff]
  %v185 = vld [vmem:[%s0 + $0x528] sm:$0xff]
  %v186 = vld [vmem:[%s0 + $0x530] sm:$0xff]
  %v187 = vld [vmem:[%s0 + $0x538] sm:$0xff]
  %v188 = vld [vmem:[%s0 + $0x540] sm:$0xff]
  %v189 = vld [vmem:[%s0 + $0x548] sm:$0xff]
  %v190 = vld [vmem:[%s0 + $0x550] sm:$0xff]
  %v191 = vld [vmem:[%s0 + $0x558] sm:$0xff]
  %v192 = vld [vmem:[%s0 + $0x560] sm:$0xff]
  %v193 = vld [vmem:[%s0 + $0x568] sm:$0xff]
  %v194 = vld [vmem:[%s0 + $0x570] sm:$0xff]
  %v195 = vld [vmem:[%s0 + $0x578] sm:$0xff]
  %v196 = vld [vmem:[%s0 + $0x580] sm:$0xff]
  %v197 = vld [vmem:[%s0 + $0x588] sm:$0xff]
  %v198 = vld [vmem:[%s0 + $0x590] sm:$0xff]
  %v199 = vld [vmem:[%s0 + $0x598] sm:$0xff]
  %v200 = vld [vmem:[%s0 + $0x5a0] sm:$0xff]
  %v201 = vld [vmem:[%s0 + $0x5a8] sm:$0xff]
  %v202 = vld [vmem:[%s0 + $0x5b0] sm:$0xff]
  %v203 = vld [vmem:[%s0 + $0x5b8] sm:$0xff]
  %v204 = vld [vmem:[%s0 + $0x5c0] sm:$0xff]
  %v205 = vld [vmem:[%s0 + $0x5c8] sm:$0xff]
  %v206 = vld [vmem:[%s0 + $0x5d0] sm:$0xff]
  %v207 = vld [vmem:[%s0 + $0x5d8] sm:$0xff]
  %v208 = vld [vmem:[%s0 + $0x5e0] sm:$0xff]
  %v209 = vld [vmem:[%s0 + $0x5e8] sm:$0xff]
  %v210 = vld [vmem:[%s0 + $0x5f0] sm:$0xff]
  %v211 = vld [vmem:[%s0 + $0x5f8] sm:$0xff]
  %v212 = vld [vmem:[%s0 + $0x600] sm:$0xff]
  %v213 = vld [vmem:[%s0 + $0x608] sm:$0xff]
  %v214 = vld [vmem:[%s0 + $0x610] sm:$0xff]
  %v215 = vld [vmem:[%s0 + $0x618] sm:$0xff]
  %v216 = vld [vmem:[%s0 + $0x620] sm:$0xff]
  %v217 = vld [vmem:[%s0 + $0x628] sm:$0xff]
  %v218 = vld [vmem:[%s0 + $0x630] sm:$0xff]
  %v219 = vld [vmem:[%s0 + $0x638] sm:$0xff]
  %v220 = vld [vmem:[%s0 + $0x640] sm:$0xff]
  %v221 = vld [vmem:[%s0 + $0x648] sm:$0xff]
  %v222 = vld [vmem:[%s0 + $0x650] sm:$0xff]
  %v223 = vld [vmem:[%s0 + $0x658] sm:$0xff]
  %v224 = vld [vmem:[%s0 + $0x660] sm:$0xff]
  %v225 = vld [vmem:[%s0 + $0x668] sm:$0xff]
  %v226 = vld [vmem:[%s0 + $0x670] sm:$0xff]
  %v227 = vld [vmem:[%s0 + $0x678] sm:$0xff]
  %v228 = vld [vmem:[%s0 + $0x680] sm:$0xff]
  %v229 = vld [vmem:[%s0 + $0x688] sm:$0xff]
  %v230 = vld [vmem:[%s0 + $0x690] sm:$0xff]
  %v231 = vld [vmem:[%s0 + $0x698] sm:$0xff]
  %v232 = vld [vmem:[%s0 + $0x6a0] sm:$0xff]
  %v233 = vld [vmem:[%s0 + $0x6a8] sm:$0xff]
  %v234 = vld [vmem:[%s0 + $0x6b0] sm:$0xff]
  %v235 = vld [vmem:[%s0 + $0x6b8] sm:$0xff]
  %v236 = vld [vmem:[%s0 + $0x6c0] sm:$0xff]
  %v237 = vld [vmem:[%s0 + $0x6c8] sm:$0xff]
  %v238 = vld [vmem:[%s0 + $0x6d0] sm:$0xff]
  %v239 = vld [vmem:[%s0 + $0x6d8] sm:$0xff]
  %v240 = vld [vmem:[%s0 + $0x6e0] sm:$0xff]
  %v241 = vld [vmem:[%s0 + $0x6e8] sm:$0xff]
  %v242 = vld [vmem:[%s0 + $0x6f0] sm:$0xff]
  %v243 = vld [vmem:[%s0 + $0x6f8] sm:$0xff]
  %v244 = vld [vmem:[%s1] sm:$0xff]
  %v245 = vld [vmem:[%s1 + $0x8] sm:$0xff]
  %v246 = vld [vmem:[%s1 + $0x10] sm:$0xff]
  %v247 = vld [vmem:[%s1 + $0x18] sm:$0xff]
  %v248 = vld [vmem:[%s1 + $0x20] sm:$0xff]
  %v249 = vld [vmem:[%s1 + $0x28] sm:$0xff]
  %v250 = vld [vmem:[%s1 + $0x30] sm:$0xff]
  %v251 = vld [vmem:[%s1 + $0x38] sm:$0xff]
  %v252 = vld [vmem:[%s1 + $0x40] sm:$0xff]
  %v253 = vld [vmem:[%s1 + $0x48] sm:$0xff]
  %v254 = vld [vmem:[%s1 + $0x50] sm:$0xff]
  %v255 = vld [vmem:[%s1 + $0x58] sm:$0xff]
  %v256 = vld [vmem:[%s1 + $0x60] sm:$0xff]
  %v257 = vld [vmem:[%s1 + $0x68] sm:$0xff]
  %v258 = vld [vmem:[%s1 + $0x70] sm:$0xff]
  %v259 = vld [vmem:[%s1 + $0x78] sm:$0xff]
  %v260 = vld [vmem:[%s1 + $0x80] sm:$0xff]
  %v261 = vld [vmem:[%s1 + $0x88] sm:$0xff]
  %v262 = vld [vmem:[%s1 + $0x90] sm:$0xff]
  %v263 = vld [vmem:[%s1 + $0x98] sm:$0xff]
  %v264 = vld [vmem:[%s1 + $0xa0] sm:$0xff]
  %v265 = vld [vmem:[%s1 + $0xa8] sm:$0xff]
  %v266 = vld [vmem:[%s1 + $0xb0] sm:$0xff]
  %v267 = vld [vmem:[%s1 + $0xb8] sm:$0xff]
  %v268 = vld [vmem:[%s1 + $0xc0] sm:$0xff]
  %v269 = vld [vmem:[%s1 + $0xc8] sm:$0xff]
  %v270 = vld [vmem:[%s1 + $0xd0] sm:$0xff]
  %v271 = vld [vmem:[%s1 + $0xd8] sm:$0xff]
  %v272 = vld [vmem:[%s1 + $0xe0] sm:$0xff]
  %v273 = vld [vmem:[%s1 + $0xe8] sm:$0xff]
  %v274 = vld [vmem:[%s1 + $0xf0] sm:$0xff]
  %v275 = vld [vmem:[%s1 + $0xf8] sm:$0xff]
  %v276 = vld [vmem:[%s1 + $0x100] sm:$0xff]
  %v277 = vld [vmem:[%s1 + $0x108] sm:$0xff]
  %v278 = vld [vmem:[%s1 + $0x110] sm:$0xff]
  %v279 = vld [vmem:[%s1 + $0x118] sm:$0xff]
  %v280 = vld [vmem:[%s1 + $0x120] sm:$0xff]
  %v281 = vld [vmem:[%s1 + $0x128] sm:$0xff]
  %v282 = vld [vmem:[%s1 + $0x130] sm:$0xff]
  %v283 = vld [vmem:[%s1 + $0x138] sm:$0xff]
  %v284 = vld [vmem:[%s1 + $0x140] sm:$0xff]
  %v285 = vld [vmem:[%s1 + $0x148] sm:$0xff]
  %v286 = vld [vmem:[%s1 + $0x150] sm:$0xff]
  %v287 = vld [vmem:[%s1 + $0x158] sm:$0xff]
  %v288 = vld [vmem:[%s1 + $0x160] sm:$0xff]
  %v289 = vld [vmem:[%s1 + $0x168] sm:$0xff]
  %v290 = vld [vmem:[%s1 + $0x170] sm:$0xff]
  %v291 = vld [vmem:[%s1 + $0x178] sm:$0xff]
  %v292 = vld [vmem:[%s1 + $0x180] sm:$0xff]
  %v293 = vld [vmem:[%s1 + $0x188] sm:$0xff]
  %v294 = vld [vmem:[%s1 + $0x190] sm:$0xff]
  %v295 = vld [vmem:[%s1 + $0x198] sm:$0xff]
  %v296 = vld [vmem:[%s1 + $0x1a0] sm:$0xff]
  %v297 = vld [vmem:[%s1 + $0x1a8] sm:$0xff]
  %v298 = vld [vmem:[%s1 + $0x1b0] sm:$0xff]
  %v299 = vld [vmem:[%s1 + $0x1b8] sm:$0xff]
  %v300 = vld [vmem:[%s1 + $0x1c0] sm:$0xff]
  %v301 = vld [vmem:[%s1 + $0x1c8] sm:$0xff]
  %v302 = vld [vmem:[%s1 + $0x1d0] sm:$0xff]
  %v303 = vld [vmem:[%s1 + $0x1d8] sm:$0xff]
  %v304 = vld [vmem:[%s1 + $0x1e0] sm:$0xff]
  %v305 = vld [vmem:[%s1 + $0x1e8] sm:$0xff]
  %v306 = vld [vmem:[%s1 + $0x1f0] sm:$0xff]
  %v307 = vld [vmem:[%s1 + $0x1f8] sm:$0xff]
  %v308 = vld [vmem:[%s1 + $0x200] sm:$0xff]
  %v309 = vld [vmem:[%s1 + $0x208] sm:$0xff]
  %v310 = vld [vmem:[%s1 + $0x210] sm:$0xff]
  %v311 = vld [vmem:[%s1 + $0x218] sm:$0xff]
  %v312 = vld [vmem:[%s1 + $0x220] sm:$0xff]
  %v313 = vld [vmem:[%s1 + $0x228] sm:$0xff]
  %v314 = vld [vmem:[%s1 + $0x230] sm:$0xff]
  %v315 = vld [vmem:[%s1 + $0x238] sm:$0xff]
  %v316 = vld [vmem:[%s1 + $0x240] sm:$0xff]
  %v317 = vld [vmem:[%s1 + $0x248] sm:$0xff]
  %v318 = vld [vmem:[%s1 + $0x250] sm:$0xff]
  %v319 = vld [vmem:[%s1 + $0x258] sm:$0xff]
  %v320 = vld [vmem:[%s1 + $0x260] sm:$0xff]
  %v321 = vld [vmem:[%s1 + $0x268] sm:$0xff]
  %v322 = vld [vmem:[%s1 + $0x270] sm:$0xff]
  %v323 = vld [vmem:[%s1 + $0x278] sm:$0xff]
  %v324 = vld [vmem:[%s1 + $0x280] sm:$0xff]
  %v325 = vld [vmem:[%s1 + $0x288] sm:$0xff]
  %v326 = vld [vmem:[%s1 + $0x290] sm:$0xff]
  %v327 = vld [vmem:[%s1 + $0x298] sm:$0xff]
  %v328 = vld [vmem:[%s1 + $0x2a0] sm:$0xff]
  %v329 = vld [vmem:[%s1 + $0x2a8] sm:$0xff]
  %v330 = vld [vmem:[%s1 + $0x2b0] sm:$0xff]
  %v331 = vld [vmem:[%s1 + $0x2b8] sm:$0xff]
  %v332 = vld [vmem:[%s1 + $0x2c0] sm:$0xff]
  %v333 = vld [vmem:[%s1 + $0x2c8] sm:$0xff]
  %v334 = vld [vmem:[%s1 + $0x2d0] sm:$0xff]
  %v335 = vld [vmem:[%s1 + $0x2d8] sm:$0xff]
  %v336 = vld [vmem:[%s1 + $0x2e0] sm:$0xff]
  %v337 = vld [vmem:[%s1 + $0x2e8] sm:$0xff]
  %v338 = vld [vmem:[%s1 + $0x2f0] sm:$0xff]
  %v339 = vld [vmem:[%s1 + $0x2f8] sm:$0xff]
  %v340 = vld [vmem:[%s1 + $0x300] sm:$0xff]
  %v341 = vld [vmem:[%s1 + $0x308] sm:$0xff]
  %v342 = vld [vmem:[%s2] sm:$0x1]
  %v344 = vlaneseq
  %v345 = vshrl.u32 %v344, 7
  %v346 = vsub.s32 0, %v345
  %v347 = vrot.slane %v342, %v346
  %vm349 = vcmask 130048
  %v351 = vsel %vm349, %v26, 0
  %v354 = vsel %vm349, %v33, 0
  %v357 = vsel %vm349, %v40, 0
  %v360 = vsel %vm349, %v47, 0
  %v363 = vsel %vm349, %v54, 0
  %v366 = vsel %vm349, %v61, 0
  %v369 = vsel %vm349, %v68, 0
  %v372 = vsel %vm349, %v75, 0
  %v375 = vsel %vm349, %v82, 0
  %v378 = vsel %vm349, %v89, 0
  %v381 = vsel %vm349, %v96, 0
  %v384 = vsel %vm349, %v103, 0
  %v387 = vsel %vm349, %v110, 0
  %v390 = vsel %vm349, %v117, 0
  %v393 = vsel %vm349, %v124, 0
  %v396 = vsel %vm349, %v131, 0
  %v399 = vsel %vm349, %v138, 0
  %v402 = vsel %vm349, %v145, 0
  %v405 = vsel %vm349, %v152, 0
  %v408 = vsel %vm349, %v159, 0
  %v411 = vsel %vm349, %v166, 0
  %v414 = vsel %vm349, %v173, 0
  %v417 = vsel %vm349, %v180, 0
  %v420 = vsel %vm349, %v187, 0
  %v423 = vsel %vm349, %v194, 0
  %v426 = vsel %vm349, %v201, 0
  %v429 = vsel %vm349, %v208, 0
  %v432 = vsel %vm349, %v215, 0
  %v435 = vsel %vm349, %v222, 0
  %v438 = vsel %vm349, %v229, 0
  %v441 = vsel %vm349, %v236, 0
  %v444 = vsel %vm349, %v243, 0
  %446 = vmatprep.subr.mxu0 0.0
  %447 = vmatpush1.msra.mxu0 %v244
  %448 = vmatprep.subr.mxu0 0.0
  %449 = vmatpush1.msra.mxu0 %v245
  %450 = vmatprep.subr.mxu0 0.0
  %451 = vmatpush1.msra.mxu0 %v246
  %452 = vmatprep.subr.mxu0 0.0
  %453 = vmatpush1.msra.mxu0 %v247
  %454 = vmatprep.subr.mxu0 0.0
  %455 = vmatpush1.msra.mxu0 %v248
  %456 = vmatprep.subr.mxu0 0.0
  %457 = vmatpush1.msra.mxu0 %v249
  %458 = vmatprep.subr.mxu0 0.0
  %459 = vmatpush1.msra.mxu0 %v250
  %460 = vmatprep.subr.mxu0 0.0
  %461 = vmatpush1.msra.mxu0 %v251
  %462 = vmatprep.subr.mxu0 0.0
  %463 = vmatpush1.msra.mxu0 %v252
  %464 = vmatprep.subr.mxu0 0.0
  %465 = vmatpush1.msra.mxu0 %v253
  %466 = vmatprep.subr.mxu0 0.0
  %467 = vmatpush1.msra.mxu0 %v254
  %468 = vmatprep.subr.mxu0 0.0
  %469 = vmatpush1.msra.mxu0 %v255
  %470 = vmatprep.subr.mxu0 0.0
  %471 = vmatpush1.msra.mxu0 %v256
  %472 = vmatprep.subr.mxu0 0.0
  %473 = vmatpush1.msra.mxu0 %v257
  %474 = vmatprep.subr.mxu0 0.0
  %475 = vmatpush1.msra.mxu0 %v258
  %476 = vmatprep.subr.mxu0 0.0
  %477 = vmatpush1.msra.mxu0 %v259
  %478 = vmatprep.subr.mxu0 0.0
  %479 = vmatpush1.msra.mxu0 %v260
  %480 = vmatprep.subr.mxu0 0.0
  %481 = vmatpush1.msra.mxu0 %v261
  %482 = vmatprep.subr.mxu0 0.0
  %483 = vmatpush1.msra.mxu0 %v262
  %484 = vmatprep.subr.mxu0 0.0
  %485 = vmatpush1.msra.mxu0 %v263
  %486 = vmatprep.subr.mxu0 0.0
  %487 = vmatpush1.msra.mxu0 %v264
  %488 = vmatprep.subr.mxu0 0.0
  %489 = vmatpush1.msra.mxu0 %v265
  %490 = vmatprep.subr.mxu0 0.0
  %491 = vmatpush1.msra.mxu0 %v266
  %492 = vmatprep.subr.mxu0 0.0
  %493 = vmatpush1.msra.mxu0 %v267
  %494 = vmatprep.subr.mxu0 0.0
  %495 = vmatpush1.msra.mxu0 %v268
  %496 = vmatprep.subr.mxu0 0.0
  %497 = vmatpush1.msra.mxu0 %v269
  %498 = vmatprep.subr.mxu0 0.0
  %499 = vmatpush1.msra.mxu0 %v270
  %500 = vmatprep.subr.mxu0 0.0
  %501 = vmatpush1.msra.mxu0 %v271
  %502 = vmatprep.subr.mxu0 0.0
  %503 = vmatpush1.msra.mxu0 %v272
  %504 = vmatprep.subr.mxu0 0.0
  %505 = vmatpush1.msra.mxu0 %v273
  %506 = vmatprep.subr.mxu0 0.0
  %507 = vmatpush1.msra.mxu0 %v274
  %508 = vmatprep.subr.mxu0 0.0
  %509 = vmatpush1.msra.mxu0 %v275
  %510 = vmatprep.mubr.f32.mxu0 %v21
  %511 = vmatmul.mubr.f32.gmra.mrb[0].mxu0 %v20
  %v512 = vpop.f32.mrb[0].mxu0
  %v513 = vadd.f32 %v347, %v512
  %v514 = vpop.f32.mrb[0].mxu0
  %515 = vmatprep.mubr.f32.mxu0 %v28
  %516 = vmatmul.mubr.f32.gmra.mrb[0].mxu0 %v27
  %v517 = vpop.f32.mrb[0].mxu0
  %v518 = vadd.f32 %v347, %v517
  %v519 = vpop.f32.mrb[0].mxu0
  %520 = vmatprep.mubr.f32.mxu0 %v35
  %521 = vmatmul.mubr.f32.gmra.mrb[0].mxu0 %v34
  %v522 = vpop.f32.mrb[0].mxu0
  %v523 = vadd.f32 %v347, %v522
  %v524 = vpop.f32.mrb[0].mxu0
  %525 = vmatprep.mubr.f32.mxu0 %v42
  %526 = vmatmul.mubr.f32.gmra.mrb[0].mxu0 %v41
  %v527 = vpop.f32.mrb[0].mxu0
  %v528 = vadd.f32 %v347, %v527
  %v529 = vpop.f32.mrb[0].mxu0
  %530 = vmatprep.mubr.f32.mxu0 %v49
  %531 = vmatmul.mubr.f32.gmra.mrb[0].mxu0 %v48
  %v532 = vpop.f32.mrb[0].mxu0
  %v533 = vadd.f32 %v347, %v532
  %v534 = vpop.f32.mrb[0].mxu0
  %535 = vmatprep.mubr.f32.mxu0 %v56
  %536 = vmatmul.mubr.f32.gmra.mrb[0].mxu0 %v55
  %v537 = vpop.f32.mrb[0].mxu0
  %v538 = vadd.f32 %v347, %v537
  %v539 = vpop.f32.mrb[0].mxu0
  %540 = vmatprep.mubr.f32.mxu0 %v63
  %541 = vmatmul.mubr.f32.gmra.mrb[0].mxu0 %v62
  %v542 = vpop.f32.mrb[0].mxu0
  %v543 = vadd.f32 %v347, %v542
  %v544 = vpop.f32.mrb[0].mxu0
  %545 = vmatprep.mubr.f32.mxu0 %v70
  %546 = vmatmul.mubr.f32.gmra.mrb[0].mxu0 %v69
  %v547 = vpop.f32.mrb[0].mxu0
  %v548 = vadd.f32 %v347, %v547
  %v549 = vpop.f32.mrb[0].mxu0
  %550 = vmatprep.mubr.f32.mxu0 %v77
  %551 = vmatmul.mubr.f32.gmra.mrb[0].mxu0 %v76
  %v552 = vpop.f32.mrb[0].mxu0
  %v553 = vadd.f32 %v347, %v552
  %v554 = vpop.f32.mrb[0].mxu0
  %555 = vmatprep.mubr.f32.mxu0 %v84
  %556 = vmatmul.mubr.f32.gmra.mrb[0].mxu0 %v83
  %v557 = vpop.f32.mrb[0].mxu0
  %v558 = vadd.f32 %v347, %v557
  %v559 = vpop.f32.mrb[0].mxu0
  %560 = vmatprep.mubr.f32.mxu0 %v91
  %561 = vmatmul.mubr.f32.gmra.mrb[0].mxu0 %v90
  %v562 = vpop.f32.mrb[0].mxu0
  %v563 = vadd.f32 %v347, %v562
  %v564 = vpop.f32.mrb[0].mxu0
  %565 = vmatprep.mubr.f32.mxu0 %v98
  %566 = vmatmul.mubr.f32.gmra.mrb[0].mxu0 %v97
  %v567 = vpop.f32.mrb[0].mxu0
  %v568 = vadd.f32 %v347, %v567
  %v569 = vpop.f32.mrb[0].mxu0
  %570 = vmatprep.mubr.f32.mxu0 %v105
  %571 = vmatmul.mubr.f32.gmra.mrb[0].mxu0 %v104
  %v572 = vpop.f32.mrb[0].mxu0
  %v573 = vadd.f32 %v347, %v572
  %v574 = vpop.f32.mrb[0].mxu0
  %575 = vmatprep.mubr.f32.mxu0 %v112
  %576 = vmatmul.mubr.f32.gmra.mrb[0].mxu0 %v111
  %v577 = vpop.f32.mrb[0].mxu0
  %v578 = vadd.f32 %v347, %v577
  %v579 = vpop.f32.mrb[0].mxu0
  %580 = vmatprep.mubr.f32.mxu0 %v119
  %581 = vmatmul.mubr.f32.gmra.mrb[0].mxu0 %v118
  %v582 = vpop.f32.mrb[0].mxu0
  %v583 = vadd.f32 %v347, %v582
  %v584 = vpop.f32.mrb[0].mxu0
  %585 = vmatprep.mubr.f32.mxu0 %v126
  %586 = vmatmul.mubr.f32.gmra.mrb[0].mxu0 %v125
  %v587 = vpop.f32.mrb[0].mxu0
  %v588 = vadd.f32 %v347, %v587
  %v589 = vpop.f32.mrb[0].mxu0
  %590 = vmatprep.mubr.f32.mxu0 %v133
  %591 = vmatmul.mubr.f32.gmra.mrb[0].mxu0 %v132
  %v592 = vpop.f32.mrb[0].mxu0
  %v593 = vadd.f32 %v347, %v592
  %v594 = vpop.f32.mrb[0].mxu0
  %595 = vmatprep.mubr.f32.mxu0 %v140
  %596 = vmatmul.mubr.f32.gmra.mrb[0].mxu0 %v139
  %v597 = vpop.f32.mrb[0].mxu0
  %v598 = vadd.f32 %v347, %v597
  %v599 = vpop.f32.mrb[0].mxu0
  %600 = vmatprep.mubr.f32.mxu0 %v147
  %601 = vmatmul.mubr.f32.gmra.mrb[0].mxu0 %v146
  %v602 = vpop.f32.mrb[0].mxu0
  %v603 = vadd.f32 %v347, %v602
  %v604 = vpop.f32.mrb[0].mxu0
  %605 = vmatprep.mubr.f32.mxu0 %v154
  %606 = vmatmul.mubr.f32.gmra.mrb[0].mxu0 %v153
  %v607 = vpop.f32.mrb[0].mxu0
  %v608 = vadd.f32 %v347, %v607
  %v609 = vpop.f32.mrb[0].mxu0
  %610 = vmatprep.mubr.f32.mxu0 %v161
  %611 = vmatmul.mubr.f32.gmra.mrb[0].mxu0 %v160
  %v612 = vpop.f32.mrb[0].mxu0
  %v613 = vadd.f32 %v347, %v612
  %v614 = vpop.f32.mrb[0].mxu0
  %615 = vmatprep.mubr.f32.mxu0 %v168
  %616 = vmatmul.mubr.f32.gmra.mrb[0].mxu0 %v167
  %v617 = vpop.f32.mrb[0].mxu0
  %v618 = vadd.f32 %v347, %v617
  %v619 = vpop.f32.mrb[0].mxu0
  %620 = vmatprep.mubr.f32.mxu0 %v175
  %621 = vmatmul.mubr.f32.gmra.mrb[0].mxu0 %v174
  %v622 = vpop.f32.mrb[0].mxu0
  %v623 = vadd.f32 %v347, %v622
  %v624 = vpop.f32.mrb[0].mxu0
  %625 = vmatprep.mubr.f32.mxu0 %v182
  %626 = vmatmul.mubr.f32.gmra.mrb[0].mxu0 %v181
  %v627 = vpop.f32.mrb[0].mxu0
  %v628 = vadd.f32 %v347, %v627
  %v629 = vpop.f32.mrb[0].mxu0
  %630 = vmatprep.mubr.f32.mxu0 %v189
  %631 = vmatmul.mubr.f32.gmra.mrb[0].mxu0 %v188
  %v632 = vpop.f32.mrb[0].mxu0
  %v633 = vadd.f32 %v347, %v632
  %v634 = vpop.f32.mrb[0].mxu0
  %635 = vmatprep.mubr.f32.mxu0 %v196
  %636 = vmatmul.mubr.f32.gmra.mrb[0].mxu0 %v195
  %v637 = vpop.f32.mrb[0].mxu0
  %v638 = vadd.f32 %v347, %v637
  %v639 = vpop.f32.mrb[0].mxu0
  %640 = vmatprep.mubr.f32.mxu0 %v203
  %641 = vmatmul.mubr.f32.gmra.mrb[0].mxu0 %v202
  %v642 = vpop.f32.mrb[0].mxu0
  %v643 = vadd.f32 %v347, %v642
  %v644 = vpop.f32.mrb[0].mxu0
  %645 = vmatprep.mubr.f32.mxu0 %v210
  %646 = vmatmul.mubr.f32.gmra.mrb[0].mxu0 %v209
  %v647 = vpop.f32.mrb[0].mxu0
  %v648 = vadd.f32 %v347, %v647
  %v649 = vpop.f32.mrb[0].mxu0
  %650 = vmatprep.mubr.f32.mxu0 %v217
  %651 = vmatmul.mubr.f32.gmra.mrb[0].mxu0 %v216
  %v652 = vpop.f32.mrb[0].mxu0
  %v653 = vadd.f32 %v347, %v652
  %v654 = vpop.f32.mrb[0].mxu0
  %655 = vmatprep.mubr.f32.mxu0 %v224
  %656 = vmatmul.mubr.f32.gmra.mrb[0].mxu0 %v223
  %v657 = vpop.f32.mrb[0].mxu0
  %v658 = vadd.f32 %v347, %v657
  %v659 = vpop.f32.mrb[0].mxu0
  %660 = vmatprep.mubr.f32.mxu0 %v231
  %661 = vmatmul.mubr.f32.gmra.mrb[0].mxu0 %v230
  %v662 = vpop.f32.mrb[0].mxu0
  %v663 = vadd.f32 %v347, %v662
  %v664 = vpop.f32.mrb[0].mxu0
  %665 = vmatprep.mubr.f32.mxu0 %v238
  %666 = vmatmul.mubr.f32.gmra.mrb[0].mxu0 %v237
  %v667 = vpop.f32.mrb[0].mxu0
  %v668 = vadd.f32 %v347, %v667
  %v669 = vpop.f32.mrb[0].mxu0
  %670 = vdwg.mxu0
  %671 = vmatprep.subr.mxu0 0.0
  %672 = vmatpush1.msra.mxu0 %v276
  %673 = vmatprep.subr.mxu0 0.0
  %674 = vmatpush1.msra.mxu0 %v277
  %675 = vmatprep.subr.mxu0 0.0
  %676 = vmatpush1.msra.mxu0 %v278
  %677 = vmatprep.subr.mxu0 0.0
  %678 = vmatpush1.msra.mxu0 %v279
  %679 = vmatprep.subr.mxu0 0.0
  %680 = vmatpush1.msra.mxu0 %v280
  %681 = vmatprep.subr.mxu0 0.0
  %682 = vmatpush1.msra.mxu0 %v281
  %683 = vmatprep.subr.mxu0 0.0
  %684 = vmatpush1.msra.mxu0 %v282
  %685 = vmatprep.subr.mxu0 0.0
  %686 = vmatpush1.msra.mxu0 %v283
  %687 = vmatprep.subr.mxu0 0.0
  %688 = vmatpush1.msra.mxu0 %v284
  %689 = vmatprep.subr.mxu0 0.0
  %690 = vmatpush1.msra.mxu0 %v285
  %691 = vmatprep.subr.mxu0 0.0
  %692 = vmatpush1.msra.mxu0 %v286
  %693 = vmatprep.subr.mxu0 0.0
  %694 = vmatpush1.msra.mxu0 %v287
  %695 = vmatprep.subr.mxu0 0.0
  %696 = vmatpush1.msra.mxu0 %v288
  %697 = vmatprep.subr.mxu0 0.0
  %698 = vmatpush1.msra.mxu0 %v289
  %699 = vmatprep.subr.mxu0 0.0
  %700 = vmatpush1.msra.mxu0 %v290
  %701 = vmatprep.subr.mxu0 0.0
  %702 = vmatpush1.msra.mxu0 %v291
  %703 = vmatprep.subr.mxu0 0.0
  %704 = vmatpush1.msra.mxu0 %v292
  %705 = vmatprep.subr.mxu0 0.0
  %706 = vmatpush1.msra.mxu0 %v293
  %707 = vmatprep.subr.mxu0 0.0
  %708 = vmatpush1.msra.mxu0 %v294
  %709 = vmatprep.subr.mxu0 0.0
  %710 = vmatpush1.msra.mxu0 %v295
  %711 = vmatprep.subr.mxu0 0.0
  %712 = vmatpush1.msra.mxu0 %v296
  %713 = vmatprep.subr.mxu0 0.0
  %714 = vmatpush1.msra.mxu0 %v297
  %715 = vmatprep.subr.mxu0 0.0
  %716 = vmatpush1.msra.mxu0 %v298
  %717 = vmatprep.subr.mxu0 0.0
  %718 = vmatpush1.msra.mxu0 %v299
  %719 = vmatprep.subr.mxu0 0.0
  %720 = vmatpush1.msra.mxu0 %v300
  %721 = vmatprep.subr.mxu0 0.0
  %722 = vmatpush1.msra.mxu0 %v301
  %723 = vmatprep.subr.mxu0 0.0
  %724 = vmatpush1.msra.mxu0 %v302
  %725 = vmatprep.subr.mxu0 0.0
  %726 = vmatpush1.msra.mxu0 %v303
  %727 = vmatprep.subr.mxu0 0.0
  %728 = vmatpush1.msra.mxu0 %v304
  %729 = vmatprep.subr.mxu0 0.0
  %730 = vmatpush1.msra.mxu0 %v305
  %731 = vmatprep.subr.mxu0 0.0
  %732 = vmatpush1.msra.mxu0 %v306
  %733 = vmatprep.subr.mxu0 0.0
  %734 = vmatpush1.msra.mxu0 %v307
  %735 = vmatprep.mubr.f32.mxu0 %v23
  %736 = vmatmul.mubr.f32.gmra.mrb[0].mxu0 %v22
  %v737 = vpop.f32.mrb[0].mxu0
  %v738 = vadd.f32 %v513, %v737
  %v739 = vpop.f32.mrb[0].mxu0
  %740 = vmatprep.mubr.f32.mxu0 %v30
  %741 = vmatmul.mubr.f32.gmra.mrb[0].mxu0 %v29
  %v742 = vpop.f32.mrb[0].mxu0
  %v743 = vadd.f32 %v518, %v742
  %v744 = vpop.f32.mrb[0].mxu0
  %745 = vmatprep.mubr.f32.mxu0 %v37
  %746 = vmatmul.mubr.f32.gmra.mrb[0].mxu0 %v36
  %v747 = vpop.f32.mrb[0].mxu0
  %v748 = vadd.f32 %v523, %v747
  %v749 = vpop.f32.mrb[0].mxu0
  %750 = vmatprep.mubr.f32.mxu0 %v44
  %751 = vmatmul.mubr.f32.gmra.mrb[0].mxu0 %v43
  %v752 = vpop.f32.mrb[0].mxu0
  %v753 = vadd.f32 %v528, %v752
  %v754 = vpop.f32.mrb[0].mxu0
  %755 = vmatprep.mubr.f32.mxu0 %v51
  %756 = vmatmul.mubr.f32.gmra.mrb[0].mxu0 %v50
  %v757 = vpop.f32.mrb[0].mxu0
  %v758 = vadd.f32 %v533, %v757
  %v759 = vpop.f32.mrb[0].mxu0
  %760 = vmatprep.mubr.f32.mxu0 %v58
  %761 = vmatmul.mubr.f32.gmra.mrb[0].mxu0 %v57
  %v762 = vpop.f32.mrb[0].mxu0
  %v763 = vadd.f32 %v538, %v762
  %v764 = vpop.f32.mrb[0].mxu0
  %765 = vmatprep.mubr.f32.mxu0 %v65
  %766 = vmatmul.mubr.f32.gmra.mrb[0].mxu0 %v64
  %v767 = vpop.f32.mrb[0].mxu0
  %v768 = vadd.f32 %v543, %v767
  %v769 = vpop.f32.mrb[0].mxu0
  %770 = vmatprep.mubr.f32.mxu0 %v72
  %771 = vmatmul.mubr.f32.gmra.mrb[0].mxu0 %v71
  %v772 = vpop.f32.mrb[0].mxu0
  %v773 = vadd.f32 %v548, %v772
  %v774 = vpop.f32.mrb[0].mxu0
  %775 = vmatprep.mubr.f32.mxu0 %v79
  %776 = vmatmul.mubr.f32.gmra.mrb[0].mxu0 %v78
  %v777 = vpop.f32.mrb[0].mxu0
  %v778 = vadd.f32 %v553, %v777
  %v779 = vpop.f32.mrb[0].mxu0
  %780 = vmatprep.mubr.f32.mxu0 %v86
  %781 = vmatmul.mubr.f32.gmra.mrb[0].mxu0 %v85
  %v782 = vpop.f32.mrb[0].mxu0
  %v783 = vadd.f32 %v558, %v782
  %v784 = vpop.f32.mrb[0].mxu0
  %785 = vmatprep.mubr.f32.mxu0 %v93
  %786 = vmatmul.mubr.f32.gmra.mrb[0].mxu0 %v92
  %v787 = vpop.f32.mrb[0].mxu0
  %v788 = vadd.f32 %v563, %v787
  %v789 = vpop.f32.mrb[0].mxu0
  %790 = vmatprep.mubr.f32.mxu0 %v100
  %791 = vmatmul.mubr.f32.gmra.mrb[0].mxu0 %v99
  %v792 = vpop.f32.mrb[0].mxu0
  %v793 = vadd.f32 %v568, %v792
  %v794 = vpop.f32.mrb[0].mxu0
  %795 = vmatprep.mubr.f32.mxu0 %v107
  %796 = vmatmul.mubr.f32.gmra.mrb[0].mxu0 %v106
  %v797 = vpop.f32.mrb[0].mxu0
  %v798 = vadd.f32 %v573, %v797
  %v799 = vpop.f32.mrb[0].mxu0
  %800 = vmatprep.mubr.f32.mxu0 %v114
  %801 = vmatmul.mubr.f32.gmra.mrb[0].mxu0 %v113
  %v802 = vpop.f32.mrb[0].mxu0
  %v803 = vadd.f32 %v578, %v802
  %v804 = vpop.f32.mrb[0].mxu0
  %805 = vmatprep.mubr.f32.mxu0 %v121
  %806 = vmatmul.mubr.f32.gmra.mrb[0].mxu0 %v120
  %v807 = vpop.f32.mrb[0].mxu0
  %v808 = vadd.f32 %v583, %v807
  %v809 = vpop.f32.mrb[0].mxu0
  %810 = vmatprep.mubr.f32.mxu0 %v128
  %811 = vmatmul.mubr.f32.gmra.mrb[0].mxu0 %v127
  %v812 = vpop.f32.mrb[0].mxu0
  %v813 = vadd.f32 %v588, %v812
  %v814 = vpop.f32.mrb[0].mxu0
  %815 = vmatprep.mubr.f32.mxu0 %v135
  %816 = vmatmul.mubr.f32.gmra.mrb[0].mxu0 %v134
  %v817 = vpop.f32.mrb[0].mxu0
  %v818 = vadd.f32 %v593, %v817
  %v819 = vpop.f32.mrb[0].mxu0
  %820 = vmatprep.mubr.f32.mxu0 %v142
  %821 = vmatmul.mubr.f32.gmra.mrb[0].mxu0 %v141
  %v822 = vpop.f32.mrb[0].mxu0
  %v823 = vadd.f32 %v598, %v822
  %v824 = vpop.f32.mrb[0].mxu0
  %825 = vmatprep.mubr.f32.mxu0 %v149
  %826 = vmatmul.mubr.f32.gmra.mrb[0].mxu0 %v148
  %v827 = vpop.f32.mrb[0].mxu0
  %v828 = vadd.f32 %v603, %v827
  %v829 = vpop.f32.mrb[0].mxu0
  %830 = vmatprep.mubr.f32.mxu0 %v156
  %831 = vmatmul.mubr.f32.gmra.mrb[0].mxu0 %v155
  %v832 = vpop.f32.mrb[0].mxu0
  %v833 = vadd.f32 %v608, %v832
  %v834 = vpop.f32.mrb[0].mxu0
  %835 = vmatprep.mubr.f32.mxu0 %v163
  %836 = vmatmul.mubr.f32.gmra.mrb[0].mxu0 %v162
  %v837 = vpop.f32.mrb[0].mxu0
  %v838 = vadd.f32 %v613, %v837
  %v839 = vpop.f32.mrb[0].mxu0
  %840 = vmatprep.mubr.f32.mxu0 %v170
  %841 = vmatmul.mubr.f32.gmra.mrb[0].mxu0 %v169
  %v842 = vpop.f32.mrb[0].mxu0
  %v843 = vadd.f32 %v618, %v842
  %v844 = vpop.f32.mrb[0].mxu0
  %845 = vmatprep.mubr.f32.mxu0 %v177
  %846 = vmatmul.mubr.f32.gmra.mrb[0].mxu0 %v176
  %v847 = vpop.f32.mrb[0].mxu0
  %v848 = vadd.f32 %v623, %v847
  %v849 = vpop.f32.mrb[0].mxu0
  %850 = vmatprep.mubr.f32.mxu0 %v184
  %851 = vmatmul.mubr.f32.gmra.mrb[0].mxu0 %v183
  %v852 = vpop.f32.mrb[0].mxu0
  %v853 = vadd.f32 %v628, %v852
  %v854 = vpop.f32.mrb[0].mxu0
  %855 = vmatprep.mubr.f32.mxu0 %v191
  %856 = vmatmul.mubr.f32.gmra.mrb[0].mxu0 %v190
  %v857 = vpop.f32.mrb[0].mxu0
  %v858 = vadd.f32 %v633, %v857
  %v859 = vpop.f32.mrb[0].mxu0
  %860 = vmatprep.mubr.f32.mxu0 %v198
  %861 = vmatmul.mubr.f32.gmra.mrb[0].mxu0 %v197
  %v862 = vpop.f32.mrb[0].mxu0
  %v863 = vadd.f32 %v638, %v862
  %v864 = vpop.f32.mrb[0].mxu0
  %865 = vmatprep.mubr.f32.mxu0 %v205
  %866 = vmatmul.mubr.f32.gmra.mrb[0].mxu0 %v204
  %v867 = vpop.f32.mrb[0].mxu0
  %v868 = vadd.f32 %v643, %v867
  %v869 = vpop.f32.mrb[0].mxu0
  %870 = vmatprep.mubr.f32.mxu0 %v212
  %871 = vmatmul.mubr.f32.gmra.mrb[0].mxu0 %v211
  %v872 = vpop.f32.mrb[0].mxu0
  %v873 = vadd.f32 %v648, %v872
  %v874 = vpop.f32.mrb[0].mxu0
  %875 = vmatprep.mubr.f32.mxu0 %v219
  %876 = vmatmul.mubr.f32.gmra.mrb[0].mxu0 %v218
  %v877 = vpop.f32.mrb[0].mxu0
  %v878 = vadd.f32 %v653, %v877
  %v879 = vpop.f32.mrb[0].mxu0
  %880 = vmatprep.mubr.f32.mxu0 %v226
  %881 = vmatmul.mubr.f32.gmra.mrb[0].mxu0 %v225
  %v882 = vpop.f32.mrb[0].mxu0
  %v883 = vadd.f32 %v658, %v882
  %v884 = vpop.f32.mrb[0].mxu0
  %885 = vmatprep.mubr.f32.mxu0 %v233
  %886 = vmatmul.mubr.f32.gmra.mrb[0].mxu0 %v232
  %v887 = vpop.f32.mrb[0].mxu0
  %v888 = vadd.f32 %v663, %v887
  %v889 = vpop.f32.mrb[0].mxu0
  %890 = vmatprep.mubr.f32.mxu0 %v240
  %891 = vmatmul.mubr.f32.gmra.mrb[0].mxu0 %v239
  %v892 = vpop.f32.mrb[0].mxu0
  %v893 = vadd.f32 %v668, %v892
  %v894 = vpop.f32.mrb[0].mxu0
  %895 = vdwg.mxu0
  %896 = vmatprep.subr.mxu0 0.0
  %897 = vmatpush1.msra.mxu0 %v308
  %898 = vmatprep.subr.mxu0 0.0
  %899 = vmatpush1.msra.mxu0 %v309
  %900 = vmatprep.subr.mxu0 0.0
  %901 = vmatpush1.msra.mxu0 %v310
  %902 = vmatprep.subr.mxu0 0.0
  %903 = vmatpush1.msra.mxu0 %v311
  %904 = vmatprep.subr.mxu0 0.0
  %905 = vmatpush1.msra.mxu0 %v312
  %906 = vmatprep.subr.mxu0 0.0
  %907 = vmatpush1.msra.mxu0 %v313
  %908 = vmatprep.subr.mxu0 0.0
  %909 = vmatpush1.msra.mxu0 %v314
  %910 = vmatprep.subr.mxu0 0.0
  %911 = vmatpush1.msra.mxu0 %v315
  %912 = vmatprep.subr.mxu0 0.0
  %913 = vmatpush1.msra.mxu0 %v316
  %914 = vmatprep.subr.mxu0 0.0
  %915 = vmatpush1.msra.mxu0 %v317
  %916 = vmatprep.subr.mxu0 0.0
  %917 = vmatpush1.msra.mxu0 %v318
  %918 = vmatprep.subr.mxu0 0.0
  %919 = vmatpush1.msra.mxu0 %v319
  %920 = vmatprep.subr.mxu0 0.0
  %921 = vmatpush1.msra.mxu0 %v320
  %922 = vmatprep.subr.mxu0 0.0
  %923 = vmatpush1.msra.mxu0 %v321
  %924 = vmatprep.subr.mxu0 0.0
  %925 = vmatpush1.msra.mxu0 %v322
  %926 = vmatprep.subr.mxu0 0.0
  %927 = vmatpush1.msra.mxu0 %v323
  %928 = vmatprep.subr.mxu0 0.0
  %929 = vmatpush1.msra.mxu0 %v324
  %930 = vmatprep.subr.mxu0 0.0
  %931 = vmatpush1.msra.mxu0 %v325
  %932 = vmatprep.subr.mxu0 0.0
  %933 = vmatpush1.msra.mxu0 %v326
  %934 = vmatprep.subr.mxu0 0.0
  %935 = vmatpush1.msra.mxu0 %v327
  %936 = vmatprep.subr.mxu0 0.0
  %937 = vmatpush1.msra.mxu0 %v328
  %938 = vmatprep.subr.mxu0 0.0
  %939 = vmatpush1.msra.mxu0 %v329
  %940 = vmatprep.subr.mxu0 0.0
  %941 = vmatpush1.msra.mxu0 %v330
  %942 = vmatprep.subr.mxu0 0.0
  %943 = vmatpush1.msra.mxu0 %v331
  %944 = vmatprep.subr.mxu0 0.0
  %945 = vmatpush1.msra.mxu0 %v332
  %946 = vmatprep.subr.mxu0 0.0
  %947 = vmatpush1.msra.mxu0 %v333
  %948 = vmatprep.subr.mxu0 0.0
  %949 = vmatpush1.msra.mxu0 %v334
  %950 = vmatprep.subr.mxu0 0.0
  %951 = vmatpush1.msra.mxu0 %v335
  %952 = vmatprep.subr.mxu0 0.0
  %953 = vmatpush1.msra.mxu0 %v336
  %954 = vmatprep.subr.mxu0 0.0
  %955 = vmatpush1.msra.mxu0 %v337
  %956 = vmatprep.subr.mxu0 0.0
  %957 = vmatpush1.msra.mxu0 %v338
  %958 = vmatprep.subr.mxu0 0.0
  %959 = vmatpush1.msra.mxu0 %v339
  %960 = vmatprep.mubr.f32.mxu0 %v25
  %961 = vmatmul.mubr.f32.gmra.mrb[0].mxu0 %v24
  %v962 = vpop.f32.mrb[0].mxu0
  %v963 = vadd.f32 %v738, %v962
  %v964 = vpop.f32.mrb[0].mxu0
  %965 = vmatprep.mubr.f32.mxu0 %v32
  %966 = vmatmul.mubr.f32.gmra.mrb[0].mxu0 %v31
  %v967 = vpop.f32.mrb[0].mxu0
  %v968 = vadd.f32 %v743, %v967
  %v969 = vpop.f32.mrb[0].mxu0
  %970 = vmatprep.mubr.f32.mxu0 %v39
  %971 = vmatmul.mubr.f32.gmra.mrb[0].mxu0 %v38
  %v972 = vpop.f32.mrb[0].mxu0
  %v973 = vadd.f32 %v748, %v972
  %v974 = vpop.f32.mrb[0].mxu0
  %975 = vmatprep.mubr.f32.mxu0 %v46
  %976 = vmatmul.mubr.f32.gmra.mrb[0].mxu0 %v45
  %v977 = vpop.f32.mrb[0].mxu0
  %v978 = vadd.f32 %v753, %v977
  %v979 = vpop.f32.mrb[0].mxu0
  %980 = vmatprep.mubr.f32.mxu0 %v53
  %981 = vmatmul.mubr.f32.gmra.mrb[0].mxu0 %v52
  %v982 = vpop.f32.mrb[0].mxu0
  %v983 = vadd.f32 %v758, %v982
  %v984 = vpop.f32.mrb[0].mxu0
  %985 = vmatprep.mubr.f32.mxu0 %v60
  %986 = vmatmul.mubr.f32.gmra.mrb[0].mxu0 %v59
  %v987 = vpop.f32.mrb[0].mxu0
  %v988 = vadd.f32 %v763, %v987
  %v989 = vpop.f32.mrb[0].mxu0
  %990 = vmatprep.mubr.f32.mxu0 %v67
  %991 = vmatmul.mubr.f32.gmra.mrb[0].mxu0 %v66
  %v992 = vpop.f32.mrb[0].mxu0
  %v993 = vadd.f32 %v768, %v992
  %v994 = vpop.f32.mrb[0].mxu0
  %995 = vmatprep.mubr.f32.mxu0 %v74
  %996 = vmatmul.mubr.f32.gmra.mrb[0].mxu0 %v73
  %v997 = vpop.f32.mrb[0].mxu0
  %v998 = vadd.f32 %v773, %v997
  %v999 = vpop.f32.mrb[0].mxu0
  %1000 = vmatprep.mubr.f32.mxu0 %v81
  %1001 = vmatmul.mubr.f32.gmra.mrb[0].mxu0 %v80
  %v1002 = vpop.f32.mrb[0].mxu0
  %v1003 = vadd.f32 %v778, %v1002
  %v1004 = vpop.f32.mrb[0].mxu0
  %1005 = vmatprep.mubr.f32.mxu0 %v88
  %1006 = vmatmul.mubr.f32.gmra.mrb[0].mxu0 %v87
  %v1007 = vpop.f32.mrb[0].mxu0
  %v1008 = vadd.f32 %v783, %v1007
  %v1009 = vpop.f32.mrb[0].mxu0
  %1010 = vmatprep.mubr.f32.mxu0 %v95
  %1011 = vmatmul.mubr.f32.gmra.mrb[0].mxu0 %v94
  %v1012 = vpop.f32.mrb[0].mxu0
  %v1013 = vadd.f32 %v788, %v1012
  %v1014 = vpop.f32.mrb[0].mxu0
  %1015 = vmatprep.mubr.f32.mxu0 %v102
  %1016 = vmatmul.mubr.f32.gmra.mrb[0].mxu0 %v101
  %v1017 = vpop.f32.mrb[0].mxu0
  %v1018 = vadd.f32 %v793, %v1017
  %v1019 = vpop.f32.mrb[0].mxu0
  %1020 = vmatprep.mubr.f32.mxu0 %v109
  %1021 = vmatmul.mubr.f32.gmra.mrb[0].mxu0 %v108
  %v1022 = vpop.f32.mrb[0].mxu0
  %v1023 = vadd.f32 %v798, %v1022
  %v1024 = vpop.f32.mrb[0].mxu0
  %1025 = vmatprep.mubr.f32.mxu0 %v116
  %1026 = vmatmul.mubr.f32.gmra.mrb[0].mxu0 %v115
  %v1027 = vpop.f32.mrb[0].mxu0
  %v1028 = vadd.f32 %v803, %v1027
  %v1029 = vpop.f32.mrb[0].mxu0
  %1030 = vmatprep.mubr.f32.mxu0 %v123
  %1031 = vmatmul.mubr.f32.gmra.mrb[0].mxu0 %v122
  %v1032 = vpop.f32.mrb[0].mxu0
  %v1033 = vadd.f32 %v808, %v1032
  %v1034 = vpop.f32.mrb[0].mxu0
  %1035 = vmatprep.mubr.f32.mxu0 %v130
  %1036 = vmatmul.mubr.f32.gmra.mrb[0].mxu0 %v129
  %v1037 = vpop.f32.mrb[0].mxu0
  %v1038 = vadd.f32 %v813, %v1037
  %v1039 = vpop.f32.mrb[0].mxu0
  %1040 = vmatprep.mubr.f32.mxu0 %v137
  %1041 = vmatmul.mubr.f32.gmra.mrb[0].mxu0 %v136
  %v1042 = vpop.f32.mrb[0].mxu0
  %v1043 = vadd.f32 %v818, %v1042
  %v1044 = vpop.f32.mrb[0].mxu0
  %1045 = vmatprep.mubr.f32.mxu0 %v144
  %1046 = vmatmul.mubr.f32.gmra.mrb[0].mxu0 %v143
  %v1047 = vpop.f32.mrb[0].mxu0
  %v1048 = vadd.f32 %v823, %v1047
  %v1049 = vpop.f32.mrb[0].mxu0
  %1050 = vmatprep.mubr.f32.mxu0 %v151
  %1051 = vmatmul.mubr.f32.gmra.mrb[0].mxu0 %v150
  %v1052 = vpop.f32.mrb[0].mxu0
  %v1053 = vadd.f32 %v828, %v1052
  %v1054 = vpop.f32.mrb[0].mxu0
  %1055 = vmatprep.mubr.f32.mxu0 %v158
  %1056 = vmatmul.mubr.f32.gmra.mrb[0].mxu0 %v157
  %v1057 = vpop.f32.mrb[0].mxu0
  %v1058 = vadd.f32 %v833, %v1057
  %v1059 = vpop.f32.mrb[0].mxu0
  %1060 = vmatprep.mubr.f32.mxu0 %v165
  %1061 = vmatmul.mubr.f32.gmra.mrb[0].mxu0 %v164
  %v1062 = vpop.f32.mrb[0].mxu0
  %v1063 = vadd.f32 %v838, %v1062
  %v1064 = vpop.f32.mrb[0].mxu0
  %1065 = vmatprep.mubr.f32.mxu0 %v172
  %1066 = vmatmul.mubr.f32.gmra.mrb[0].mxu0 %v171
  %v1067 = vpop.f32.mrb[0].mxu0
  %v1068 = vadd.f32 %v843, %v1067
  %v1069 = vpop.f32.mrb[0].mxu0
  %1070 = vmatprep.mubr.f32.mxu0 %v179
  %1071 = vmatmul.mubr.f32.gmra.mrb[0].mxu0 %v178
  %v1072 = vpop.f32.mrb[0].mxu0
  %v1073 = vadd.f32 %v848, %v1072
  %v1074 = vpop.f32.mrb[0].mxu0
  %1075 = vmatprep.mubr.f32.mxu0 %v186
  %1076 = vmatmul.mubr.f32.gmra.mrb[0].mxu0 %v185
  %v1077 = vpop.f32.mrb[0].mxu0
  %v1078 = vadd.f32 %v853, %v1077
  %v1079 = vpop.f32.mrb[0].mxu0
  %1080 = vmatprep.mubr.f32.mxu0 %v193
  %1081 = vmatmul.mubr.f32.gmra.mrb[0].mxu0 %v192
  %v1082 = vpop.f32.mrb[0].mxu0
  %v1083 = vadd.f32 %v858, %v1082
  %v1084 = vpop.f32.mrb[0].mxu0
  %1085 = vmatprep.mubr.f32.mxu0 %v200
  %1086 = vmatmul.mubr.f32.gmra.mrb[0].mxu0 %v199
  %v1087 = vpop.f32.mrb[0].mxu0
  %v1088 = vadd.f32 %v863, %v1087
  %v1089 = vpop.f32.mrb[0].mxu0
  %1090 = vmatprep.mubr.f32.mxu0 %v207
  %1091 = vmatmul.mubr.f32.gmra.mrb[0].mxu0 %v206
  %v1092 = vpop.f32.mrb[0].mxu0
  %v1093 = vadd.f32 %v868, %v1092
  %v1094 = vpop.f32.mrb[0].mxu0
  %1095 = vmatprep.mubr.f32.mxu0 %v214
  %1096 = vmatmul.mubr.f32.gmra.mrb[0].mxu0 %v213
  %v1097 = vpop.f32.mrb[0].mxu0
  %v1098 = vadd.f32 %v873, %v1097
  %v1099 = vpop.f32.mrb[0].mxu0
  %1100 = vmatprep.mubr.f32.mxu0 %v221
  %1101 = vmatmul.mubr.f32.gmra.mrb[0].mxu0 %v220
  %v1102 = vpop.f32.mrb[0].mxu0
  %v1103 = vadd.f32 %v878, %v1102
  %v1104 = vpop.f32.mrb[0].mxu0
  %1105 = vmatprep.mubr.f32.mxu0 %v228
  %1106 = vmatmul.mubr.f32.gmra.mrb[0].mxu0 %v227
  %v1107 = vpop.f32.mrb[0].mxu0
  %v1108 = vadd.f32 %v883, %v1107
  %v1109 = vpop.f32.mrb[0].mxu0
  %1110 = vmatprep.mubr.f32.mxu0 %v235
  %1111 = vmatmul.mubr.f32.gmra.mrb[0].mxu0 %v234
  %v1112 = vpop.f32.mrb[0].mxu0
  %v1113 = vadd.f32 %v888, %v1112
  %v1114 = vpop.f32.mrb[0].mxu0
  %1115 = vmatprep.mubr.f32.mxu0 %v242
  %1116 = vmatmul.mubr.f32.gmra.mrb[0].mxu0 %v241
  %v1117 = vpop.f32.mrb[0].mxu0
  %v1118 = vadd.f32 %v893, %v1117
  %v1119 = vpop.f32.mrb[0].mxu0
  %1120 = vdwg.mxu0
  %1121 = vmatprep.subr.mxu0 0.0
  %1122 = vmatpush1.msra.mxu0 %v340
  %1123 = vmatprep.subr.mxu0 0.0
  %1124 = vmatpush1.msra.mxu0 %v341
  %1125 = vmatprep.subr.mxu0 0.0
  %1126 = vmatpush1.msra.mxu0 0.0
  %1127 = vmatprep.subr.mxu0 0.0
  %1128 = vmatpush1.msra.mxu0 0.0
  %1129 = vmatprep.subr.mxu0 0.0
  %1130 = vmatpush1.msra.mxu0 0.0
  %1131 = vmatprep.subr.mxu0 0.0
  %1132 = vmatpush1.msra.mxu0 0.0
  %1133 = vmatprep.subr.mxu0 0.0
  %1134 = vmatpush1.msra.mxu0 0.0
  %1135 = vmatprep.subr.mxu0 0.0
  %1136 = vmatpush1.msra.mxu0 0.0
  %1137 = vmatprep.subr.mxu0 0.0
  %1138 = vmatpush1.msra.mxu0 0.0
  %1139 = vmatprep.subr.mxu0 0.0
  %1140 = vmatpush1.msra.mxu0 0.0
  %1141 = vmatprep.subr.mxu0 0.0
  %1142 = vmatpush1.msra.mxu0 0.0
  %1143 = vmatprep.subr.mxu0 0.0
  %1144 = vmatpush1.msra.mxu0 0.0
  %1145 = vmatprep.subr.mxu0 0.0
  %1146 = vmatpush1.msra.mxu0 0.0
  %1147 = vmatprep.subr.mxu0 0.0
  %1148 = vmatpush1.msra.mxu0 0.0
  %1149 = vmatprep.subr.mxu0 0.0
  %1150 = vmatpush1.msra.mxu0 0.0
  %1151 = vmatprep.subr.mxu0 0.0
  %1152 = vmatpush1.msra.mxu0 0.0
  %1153 = vmatprep.subr.mxu0 0.0
  %1154 = vmatpush1.msra.mxu0 0.0
  %1155 = vmatprep.subr.mxu0 0.0
  %1156 = vmatpush1.msra.mxu0 0.0
  %1157 = vmatprep.subr.mxu0 0.0
  %1158 = vmatpush1.msra.mxu0 0.0
  %1159 = vmatprep.subr.mxu0 0.0
  %1160 = vmatpush1.msra.mxu0 0.0
  %1161 = vmatprep.subr.mxu0 0.0
  %1162 = vmatpush1.msra.mxu0 0.0
  %1163 = vmatprep.subr.mxu0 0.0
  %1164 = vmatpush1.msra.mxu0 0.0
  %1165 = vmatprep.subr.mxu0 0.0
  %1166 = vmatpush1.msra.mxu0 0.0
  %1167 = vmatprep.subr.mxu0 0.0
  %1168 = vmatpush1.msra.mxu0 0.0
  %1169 = vmatprep.subr.mxu0 0.0
  %1170 = vmatpush1.msra.mxu0 0.0
  %1171 = vmatprep.subr.mxu0 0.0
  %1172 = vmatpush1.msra.mxu0 0.0
  %1173 = vmatprep.subr.mxu0 0.0
  %1174 = vmatpush1.msra.mxu0 0.0
  %1175 = vmatprep.subr.mxu0 0.0
  %1176 = vmatpush1.msra.mxu0 0.0
  %1177 = vmatprep.subr.mxu0 0.0
  %1178 = vmatpush1.msra.mxu0 0.0
  %1179 = vmatprep.subr.mxu0 0.0
  %1180 = vmatpush1.msra.mxu0 0.0
  %1181 = vmatprep.subr.mxu0 0.0
  %1182 = vmatpush1.msra.mxu0 0.0
  %1183 = vmatprep.subr.mxu0 0.0
  %1184 = vmatpush1.msra.mxu0 0.0
  %1185 = vmatprep.mubr.f32.mxu0 0.0
  %1186 = vmatmul.mubr.f32.gmra.mrb[0].mxu0 %v351
  %v1187 = vpop.f32.mrb[0].mxu0
  %v1188 = vadd.f32 %v963, %v1187
  %v1189 = vpop.f32.mrb[0].mxu0
  %1190 = vmatprep.mubr.f32.mxu0 0.0
  %1191 = vmatmul.mubr.f32.gmra.mrb[0].mxu0 %v354
  %v1192 = vpop.f32.mrb[0].mxu0
  %v1193 = vadd.f32 %v968, %v1192
  %v1194 = vpop.f32.mrb[0].mxu0
  %1195 = vmatprep.mubr.f32.mxu0 0.0
  %1196 = vmatmul.mubr.f32.gmra.mrb[0].mxu0 %v357
  %v1197 = vpop.f32.mrb[0].mxu0
  %v1198 = vadd.f32 %v973, %v1197
  %v1199 = vpop.f32.mrb[0].mxu0
  %1200 = vmatprep.mubr.f32.mxu0 0.0
  %1201 = vmatmul.mubr.f32.gmra.mrb[0].mxu0 %v360
  %v1202 = vpop.f32.mrb[0].mxu0
  %v1203 = vadd.f32 %v978, %v1202
  %v1204 = vpop.f32.mrb[0].mxu0
  %1205 = vmatprep.mubr.f32.mxu0 0.0
  %1206 = vmatmul.mubr.f32.gmra.mrb[0].mxu0 %v363
  %v1207 = vpop.f32.mrb[0].mxu0
  %v1208 = vadd.f32 %v983, %v1207
  %v1209 = vpop.f32.mrb[0].mxu0
  %1210 = vmatprep.mubr.f32.mxu0 0.0
  %1211 = vmatmul.mubr.f32.gmra.mrb[0].mxu0 %v366
  %v1212 = vpop.f32.mrb[0].mxu0
  %v1213 = vadd.f32 %v988, %v1212
  %v1214 = vpop.f32.mrb[0].mxu0
  %1215 = vmatprep.mubr.f32.mxu0 0.0
  %1216 = vmatmul.mubr.f32.gmra.mrb[0].mxu0 %v369
  %v1217 = vpop.f32.mrb[0].mxu0
  %v1218 = vadd.f32 %v993, %v1217
  %v1219 = vpop.f32.mrb[0].mxu0
  %1220 = vmatprep.mubr.f32.mxu0 0.0
  %1221 = vmatmul.mubr.f32.gmra.mrb[0].mxu0 %v372
  %v1222 = vpop.f32.mrb[0].mxu0
  %v1223 = vadd.f32 %v998, %v1222
  %v1224 = vpop.f32.mrb[0].mxu0
  %1225 = vmatprep.mubr.f32.mxu0 0.0
  %1226 = vmatmul.mubr.f32.gmra.mrb[0].mxu0 %v375
  %v1227 = vpop.f32.mrb[0].mxu0
  %v1228 = vadd.f32 %v1003, %v1227
  %v1229 = vpop.f32.mrb[0].mxu0
  %1230 = vmatprep.mubr.f32.mxu0 0.0
  %1231 = vmatmul.mubr.f32.gmra.mrb[0].mxu0 %v378
  %v1232 = vpop.f32.mrb[0].mxu0
  %v1233 = vadd.f32 %v1008, %v1232
  %v1234 = vpop.f32.mrb[0].mxu0
  %1235 = vmatprep.mubr.f32.mxu0 0.0
  %1236 = vmatmul.mubr.f32.gmra.mrb[0].mxu0 %v381
  %v1237 = vpop.f32.mrb[0].mxu0
  %v1238 = vadd.f32 %v1013, %v1237
  %v1239 = vpop.f32.mrb[0].mxu0
  %1240 = vmatprep.mubr.f32.mxu0 0.0
  %1241 = vmatmul.mubr.f32.gmra.mrb[0].mxu0 %v384
  %v1242 = vpop.f32.mrb[0].mxu0
  %v1243 = vadd.f32 %v1018, %v1242
  %v1244 = vpop.f32.mrb[0].mxu0
  %1245 = vmatprep.mubr.f32.mxu0 0.0
  %1246 = vmatmul.mubr.f32.gmra.mrb[0].mxu0 %v387
  %v1247 = vpop.f32.mrb[0].mxu0
  %v1248 = vadd.f32 %v1023, %v1247
  %v1249 = vpop.f32.mrb[0].mxu0
  %1250 = vmatprep.mubr.f32.mxu0 0.0
  %1251 = vmatmul.mubr.f32.gmra.mrb[0].mxu0 %v390
  %v1252 = vpop.f32.mrb[0].mxu0
  %v1253 = vadd.f32 %v1028, %v1252
  %v1254 = vpop.f32.mrb[0].mxu0
  %1255 = vmatprep.mubr.f32.mxu0 0.0
  %1256 = vmatmul.mubr.f32.gmra.mrb[0].mxu0 %v393
  %v1257 = vpop.f32.mrb[0].mxu0
  %v1258 = vadd.f32 %v1033, %v1257
  %v1259 = vpop.f32.mrb[0].mxu0
  %1260 = vmatprep.mubr.f32.mxu0 0.0
  %1261 = vmatmul.mubr.f32.gmra.mrb[0].mxu0 %v396
  %v1262 = vpop.f32.mrb[0].mxu0
  %v1263 = vadd.f32 %v1038, %v1262
  %v1264 = vpop.f32.mrb[0].mxu0
  %1265 = vmatprep.mubr.f32.mxu0 0.0
  %1266 = vmatmul.mubr.f32.gmra.mrb[0].mxu0 %v399
  %v1267 = vpop.f32.mrb[0].mxu0
  %v1268 = vadd.f32 %v1043, %v1267
  %v1269 = vpop.f32.mrb[0].mxu0
  %1270 = vmatprep.mubr.f32.mxu0 0.0
  %1271 = vmatmul.mubr.f32.gmra.mrb[0].mxu0 %v402
  %v1272 = vpop.f32.mrb[0].mxu0
  %v1273 = vadd.f32 %v1048, %v1272
  %v1274 = vpop.f32.mrb[0].mxu0
  %1275 = vmatprep.mubr.f32.mxu0 0.0
  %1276 = vmatmul.mubr.f32.gmra.mrb[0].mxu0 %v405
  %v1277 = vpop.f32.mrb[0].mxu0
  %v1278 = vadd.f32 %v1053, %v1277
  %v1279 = vpop.f32.mrb[0].mxu0
  %1280 = vmatprep.mubr.f32.mxu0 0.0
  %1281 = vmatmul.mubr.f32.gmra.mrb[0].mxu0 %v408
  %v1282 = vpop.f32.mrb[0].mxu0
  %v1283 = vadd.f32 %v1058, %v1282
  %v1284 = vpop.f32.mrb[0].mxu0
  %1285 = vmatprep.mubr.f32.mxu0 0.0
  %1286 = vmatmul.mubr.f32.gmra.mrb[0].mxu0 %v411
  %v1287 = vpop.f32.mrb[0].mxu0
  %v1288 = vadd.f32 %v1063, %v1287
  %v1289 = vpop.f32.mrb[0].mxu0
  %1290 = vmatprep.mubr.f32.mxu0 0.0
  %1291 = vmatmul.mubr.f32.gmra.mrb[0].mxu0 %v414
  %v1292 = vpop.f32.mrb[0].mxu0
  %v1293 = vadd.f32 %v1068, %v1292
  %v1294 = vpop.f32.mrb[0].mxu0
  %1295 = vmatprep.mubr.f32.mxu0 0.0
  %1296 = vmatmul.mubr.f32.gmra.mrb[0].mxu0 %v417
  %v1297 = vpop.f32.mrb[0].mxu0
  %v1298 = vadd.f32 %v1073, %v1297
  %v1299 = vpop.f32.mrb[0].mxu0
  %1300 = vmatprep.mubr.f32.mxu0 0.0
  %1301 = vmatmul.mubr.f32.gmra.mrb[0].mxu0 %v420
  %v1302 = vpop.f32.mrb[0].mxu0
  %v1303 = vadd.f32 %v1078, %v1302
  %v1304 = vpop.f32.mrb[0].mxu0
  %1305 = vmatprep.mubr.f32.mxu0 0.0
  %1306 = vmatmul.mubr.f32.gmra.mrb[0].mxu0 %v423
  %v1307 = vpop.f32.mrb[0].mxu0
  %v1308 = vadd.f32 %v1083, %v1307
  %v1309 = vpop.f32.mrb[0].mxu0
  %1310 = vmatprep.mubr.f32.mxu0 0.0
  %1311 = vmatmul.mubr.f32.gmra.mrb[0].mxu0 %v426
  %v1312 = vpop.f32.mrb[0].mxu0
  %v1313 = vadd.f32 %v1088, %v1312
  %v1314 = vpop.f32.mrb[0].mxu0
  %1315 = vmatprep.mubr.f32.mxu0 0.0
  %1316 = vmatmul.mubr.f32.gmra.mrb[0].mxu0 %v429
  %v1317 = vpop.f32.mrb[0].mxu0
  %v1318 = vadd.f32 %v1093, %v1317
  %v1319 = vpop.f32.mrb[0].mxu0
  %1320 = vmatprep.mubr.f32.mxu0 0.0
  %1321 = vmatmul.mubr.f32.gmra.mrb[0].mxu0 %v432
  %v1322 = vpop.f32.mrb[0].mxu0
  %v1323 = vadd.f32 %v1098, %v1322
  %v1324 = vpop.f32.mrb[0].mxu0
  %1325 = vmatprep.mubr.f32.mxu0 0.0
  %1326 = vmatmul.mubr.f32.gmra.mrb[0].mxu0 %v435
  %v1327 = vpop.f32.mrb[0].mxu0
  %v1328 = vadd.f32 %v1103, %v1327
  %v1329 = vpop.f32.mrb[0].mxu0
  %1330 = vmatprep.mubr.f32.mxu0 0.0
  %1331 = vmatmul.mubr.f32.gmra.mrb[0].mxu0 %v438
  %v1332 = vpop.f32.mrb[0].mxu0
  %v1333 = vadd.f32 %v1108, %v1332
  %v1334 = vpop.f32.mrb[0].mxu0
  %1335 = vmatprep.mubr.f32.mxu0 0.0
  %1336 = vmatmul.mubr.f32.gmra.mrb[0].mxu0 %v441
  %v1337 = vpop.f32.mrb[0].mxu0
  %v1338 = vadd.f32 %v1113, %v1337
  %v1339 = vpop.f32.mrb[0].mxu0
  %1340 = vmatprep.mubr.f32.mxu0 0.0
  %1341 = vmatmul.mubr.f32.gmra.mrb[0].mxu0 %v444
  %v1342 = vpop.f32.mrb[0].mxu0
  %v1343 = vadd.f32 %v1118, %v1342
  %v1344 = vpop.f32.mrb[0].mxu0
  %1345 = vdwg.mxu0
  %v1346 = vmax.f32 %v1188, 0.0
  %v1347 = vmax.f32 %v1193, 0.0
  %v1348 = vmax.f32 %v1198, 0.0
  %v1349 = vmax.f32 %v1203, 0.0
  %v1350 = vmax.f32 %v1208, 0.0
  %v1351 = vmax.f32 %v1213, 0.0
  %v1352 = vmax.f32 %v1218, 0.0
  %v1353 = vmax.f32 %v1223, 0.0
  %v1354 = vmax.f32 %v1228, 0.0
  %v1355 = vmax.f32 %v1233, 0.0
  %v1356 = vmax.f32 %v1238, 0.0
  %v1357 = vmax.f32 %v1243, 0.0
  %v1358 = vmax.f32 %v1248, 0.0
  %v1359 = vmax.f32 %v1253, 0.0
  %v1360 = vmax.f32 %v1258, 0.0
  %v1361 = vmax.f32 %v1263, 0.0
  %v1362 = vmax.f32 %v1268, 0.0
  %v1363 = vmax.f32 %v1273, 0.0
  %v1364 = vmax.f32 %v1278, 0.0
  %v1365 = vmax.f32 %v1283, 0.0
  %v1366 = vmax.f32 %v1288, 0.0
  %v1367 = vmax.f32 %v1293, 0.0
  %v1368 = vmax.f32 %v1298, 0.0
  %v1369 = vmax.f32 %v1303, 0.0
  %v1370 = vmax.f32 %v1308, 0.0
  %v1371 = vmax.f32 %v1313, 0.0
  %v1372 = vmax.f32 %v1318, 0.0
  %v1373 = vmax.f32 %v1323, 0.0
  %v1374 = vmax.f32 %v1328, 0.0
  %v1375 = vmax.f32 %v1333, 0.0
  %v1376 = vmax.f32 %v1338, 0.0
  %v1377 = vmax.f32 %v1343, 0.0
  %v1378 = vld [vmem:[%s3] sm:$0xff]
  %v1379 = vld [vmem:[%s3 + $0x8] sm:$0xff]
  %v1380 = vld [vmem:[%s3 + $0x10] sm:$0xff]
  %v1381 = vld [vmem:[%s3 + $0x18] sm:$0xff]
  %v1382 = vld [vmem:[%s3 + $0x20] sm:$0xff]
  %v1383 = vld [vmem:[%s3 + $0x28] sm:$0xff]
  %v1384 = vld [vmem:[%s3 + $0x30] sm:$0xff]
  %v1385 = vld [vmem:[%s3 + $0x38] sm:$0xff]
  %v1386 = vld [vmem:[%s3 + $0x40] sm:$0xff]
  %v1387 = vld [vmem:[%s3 + $0x48] sm:$0xff]
  %v1388 = vld [vmem:[%s3 + $0x50] sm:$0xff]
  %v1389 = vld [vmem:[%s3 + $0x58] sm:$0xff]
  %v1390 = vld [vmem:[%s3 + $0x60] sm:$0xff]
  %v1391 = vld [vmem:[%s3 + $0x68] sm:$0xff]
  %v1392 = vld [vmem:[%s3 + $0x70] sm:$0xff]
  %v1393 = vld [vmem:[%s3 + $0x78] sm:$0xff]
  %v1394 = vld [vmem:[%s4] sm:$0x1]
  %v1396 = vlaneseq
  %v1397 = vshrl.u32 %v1396, 7
  %v1398 = vsub.s32 0, %v1397
  %v1399 = vrot.slane %v1394, %v1398
  %1401 = vmatprep.subr.mxu0 0.0
  %1402 = vmatpush1.msra.mxu0 %v1378
  %1403 = vmatprep.subr.mxu0 0.0
  %1404 = vmatpush1.msra.mxu0 %v1379
  %1405 = vmatprep.subr.mxu0 0.0
  %1406 = vmatpush1.msra.mxu0 %v1380
  %1407 = vmatprep.subr.mxu0 0.0
  %1408 = vmatpush1.msra.mxu0 %v1381
  %1409 = vmatprep.subr.mxu0 0.0
  %1410 = vmatpush1.msra.mxu0 %v1382
  %1411 = vmatprep.subr.mxu0 0.0
  %1412 = vmatpush1.msra.mxu0 %v1383
  %1413 = vmatprep.subr.mxu0 0.0
  %1414 = vmatpush1.msra.mxu0 %v1384
  %1415 = vmatprep.subr.mxu0 0.0
  %1416 = vmatpush1.msra.mxu0 %v1385
  %1417 = vmatprep.subr.mxu0 0.0
  %1418 = vmatpush1.msra.mxu0 %v1386
  %1419 = vmatprep.subr.mxu0 0.0
  %1420 = vmatpush1.msra.mxu0 %v1387
  %1421 = vmatprep.subr.mxu0 0.0
  %1422 = vmatpush1.msra.mxu0 %v1388
  %1423 = vmatprep.subr.mxu0 0.0
  %1424 = vmatpush1.msra.mxu0 %v1389
  %1425 = vmatprep.subr.mxu0 0.0
  %1426 = vmatpush1.msra.mxu0 %v1390
  %1427 = vmatprep.subr.mxu0 0.0
  %1428 = vmatpush1.msra.mxu0 %v1391
  %1429 = vmatprep.subr.mxu0 0.0
  %1430 = vmatpush1.msra.mxu0 %v1392
  %1431 = vmatprep.subr.mxu0 0.0
  %1432 = vmatpush1.msra.mxu0 %v1393
  %1433 = vmatprep.subr.mxu0 0.0
  %1434 = vmatpush1.msra.mxu0 0.0
  %1435 = vmatprep.subr.mxu0 0.0
  %1436 = vmatpush1.msra.mxu0 0.0
  %1437 = vmatprep.subr.mxu0 0.0
  %1438 = vmatpush1.msra.mxu0 0.0
  %1439 = vmatprep.subr.mxu0 0.0
  %1440 = vmatpush1.msra.mxu0 0.0
  %1441 = vmatprep.subr.mxu0 0.0
  %1442 = vmatpush1.msra.mxu0 0.0
  %1443 = vmatprep.subr.mxu0 0.0
  %1444 = vmatpush1.msra.mxu0 0.0
  %1445 = vmatprep.subr.mxu0 0.0
  %1446 = vmatpush1.msra.mxu0 0.0
  %1447 = vmatprep.subr.mxu0 0.0
  %1448 = vmatpush1.msra.mxu0 0.0
  %1449 = vmatprep.subr.mxu0 0.0
  %1450 = vmatpush1.msra.mxu0 0.0
  %1451 = vmatprep.subr.mxu0 0.0
  %1452 = vmatpush1.msra.mxu0 0.0
  %1453 = vmatprep.subr.mxu0 0.0
  %1454 = vmatpush1.msra.mxu0 0.0
  %1455 = vmatprep.subr.mxu0 0.0
  %1456 = vmatpush1.msra.mxu0 0.0
  %1457 = vmatprep.subr.mxu0 0.0
  %1458 = vmatpush1.msra.mxu0 0.0
  %1459 = vmatprep.subr.mxu0 0.0
  %1460 = vmatpush1.msra.mxu0 0.0
  %1461 = vmatprep.subr.mxu0 0.0
  %1462 = vmatpush1.msra.mxu0 0.0
  %1463 = vmatprep.subr.mxu0 0.0
  %1464 = vmatpush1.msra.mxu0 0.0
  %1465 = vmatprep.mubr.f32.mxu0 0.0
  %1466 = vmatmul.mubr.f32.gmra.mrb[0].mxu0 %v1346
  %v1467 = vpop.f32.mrb[0].mxu0
  %v1468 = vadd.f32 %v1399, %v1467
  %v1469 = vpop.f32.mrb[0].mxu0
  %1470 = vmatprep.mubr.f32.mxu0 0.0
  %1471 = vmatmul.mubr.f32.gmra.mrb[0].mxu0 %v1347
  %v1472 = vpop.f32.mrb[0].mxu0
  %v1473 = vadd.f32 %v1399, %v1472
  %v1474 = vpop.f32.mrb[0].mxu0
  %1475 = vmatprep.mubr.f32.mxu0 0.0
  %1476 = vmatmul.mubr.f32.gmra.mrb[0].mxu0 %v1348
  %v1477 = vpop.f32.mrb[0].mxu0
  %v1478 = vadd.f32 %v1399, %v1477
  %v1479 = vpop.f32.mrb[0].mxu0
  %1480 = vmatprep.mubr.f32.mxu0 0.0
  %1481 = vmatmul.mubr.f32.gmra.mrb[0].mxu0 %v1349
  %v1482 = vpop.f32.mrb[0].mxu0
  %v1483 = vadd.f32 %v1399, %v1482
  %v1484 = vpop.f32.mrb[0].mxu0
  %1485 = vmatprep.mubr.f32.mxu0 0.0
  %1486 = vmatmul.mubr.f32.gmra.mrb[0].mxu0 %v1350
  %v1487 = vpop.f32.mrb[0].mxu0
  %v1488 = vadd.f32 %v1399, %v1487
  %v1489 = vpop.f32.mrb[0].mxu0
  %1490 = vmatprep.mubr.f32.mxu0 0.0
  %1491 = vmatmul.mubr.f32.gmra.mrb[0].mxu0 %v1351
  %v1492 = vpop.f32.mrb[0].mxu0
  %v1493 = vadd.f32 %v1399, %v1492
  %v1494 = vpop.f32.mrb[0].mxu0
  %1495 = vmatprep.mubr.f32.mxu0 0.0
  %1496 = vmatmul.mubr.f32.gmra.mrb[0].mxu0 %v1352
  %v1497 = vpop.f32.mrb[0].mxu0
  %v1498 = vadd.f32 %v1399, %v1497
  %v1499 = vpop.f32.mrb[0].mxu0
  %1500 = vmatprep.mubr.f32.mxu0 0.0
  %1501 = vmatmul.mubr.f32.gmra.mrb[0].mxu0 %v1353
  %v1502 = vpop.f32.mrb[0].mxu0
  %v1503 = vadd.f32 %v1399, %v1502
  %v1504 = vpop.f32.mrb[0].mxu0
  %1505 = vmatprep.mubr.f32.mxu0 0.0
  %1506 = vmatmul.mubr.f32.gmra.mrb[0].mxu0 %v1354
  %v1507 = vpop.f32.mrb[0].mxu0
  %v1508 = vadd.f32 %v1399, %v1507
  %v1509 = vpop.f32.mrb[0].mxu0
  %1510 = vmatprep.mubr.f32.mxu0 0.0
  %1511 = vmatmul.mubr.f32.gmra.mrb[0].mxu0 %v1355
  %v1512 = vpop.f32.mrb[0].mxu0
  %v1513 = vadd.f32 %v1399, %v1512
  %v1514 = vpop.f32.mrb[0].mxu0
  %1515 = vmatprep.mubr.f32.mxu0 0.0
  %1516 = vmatmul.mubr.f32.gmra.mrb[0].mxu0 %v1356
  %v1517 = vpop.f32.mrb[0].mxu0
  %v1518 = vadd.f32 %v1399, %v1517
  %v1519 = vpop.f32.mrb[0].mxu0
  %1520 = vmatprep.mubr.f32.mxu0 0.0
  %1521 = vmatmul.mubr.f32.gmra.mrb[0].mxu0 %v1357
  %v1522 = vpop.f32.mrb[0].mxu0
  %v1523 = vadd.f32 %v1399, %v1522
  %v1524 = vpop.f32.mrb[0].mxu0
  %1525 = vmatprep.mubr.f32.mxu0 0.0
  %1526 = vmatmul.mubr.f32.gmra.mrb[0].mxu0 %v1358
  %v1527 = vpop.f32.mrb[0].mxu0
  %v1528 = vadd.f32 %v1399, %v1527
  %v1529 = vpop.f32.mrb[0].mxu0
  %1530 = vmatprep.mubr.f32.mxu0 0.0
  %1531 = vmatmul.mubr.f32.gmra.mrb[0].mxu0 %v1359
  %v1532 = vpop.f32.mrb[0].mxu0
  %v1533 = vadd.f32 %v1399, %v1532
  %v1534 = vpop.f32.mrb[0].mxu0
  %1535 = vmatprep.mubr.f32.mxu0 0.0
  %1536 = vmatmul.mubr.f32.gmra.mrb[0].mxu0 %v1360
  %v1537 = vpop.f32.mrb[0].mxu0
  %v1538 = vadd.f32 %v1399, %v1537
  %v1539 = vpop.f32.mrb[0].mxu0
  %1540 = vmatprep.mubr.f32.mxu0 0.0
  %1541 = vmatmul.mubr.f32.gmra.mrb[0].mxu0 %v1361
  %v1542 = vpop.f32.mrb[0].mxu0
  %v1543 = vadd.f32 %v1399, %v1542
  %v1544 = vpop.f32.mrb[0].mxu0
  %1545 = vmatprep.mubr.f32.mxu0 0.0
  %1546 = vmatmul.mubr.f32.gmra.mrb[0].mxu0 %v1362
  %v1547 = vpop.f32.mrb[0].mxu0
  %v1548 = vadd.f32 %v1399, %v1547
  %v1549 = vpop.f32.mrb[0].mxu0
  %1550 = vmatprep.mubr.f32.mxu0 0.0
  %1551 = vmatmul.mubr.f32.gmra.mrb[0].mxu0 %v1363
  %v1552 = vpop.f32.mrb[0].mxu0
  %v1553 = vadd.f32 %v1399, %v1552
  %v1554 = vpop.f32.mrb[0].mxu0
  %1555 = vmatprep.mubr.f32.mxu0 0.0
  %1556 = vmatmul.mubr.f32.gmra.mrb[0].mxu0 %v1364
  %v1557 = vpop.f32.mrb[0].mxu0
  %v1558 = vadd.f32 %v1399, %v1557
  %v1559 = vpop.f32.mrb[0].mxu0
  %1560 = vmatprep.mubr.f32.mxu0 0.0
  %1561 = vmatmul.mubr.f32.gmra.mrb[0].mxu0 %v1365
  %v1562 = vpop.f32.mrb[0].mxu0
  %v1563 = vadd.f32 %v1399, %v1562
  %v1564 = vpop.f32.mrb[0].mxu0
  %1565 = vmatprep.mubr.f32.mxu0 0.0
  %1566 = vmatmul.mubr.f32.gmra.mrb[0].mxu0 %v1366
  %v1567 = vpop.f32.mrb[0].mxu0
  %v1568 = vadd.f32 %v1399, %v1567
  %v1569 = vpop.f32.mrb[0].mxu0
  %1570 = vmatprep.mubr.f32.mxu0 0.0
  %1571 = vmatmul.mubr.f32.gmra.mrb[0].mxu0 %v1367
  %v1572 = vpop.f32.mrb[0].mxu0
  %v1573 = vadd.f32 %v1399, %v1572
  %v1574 = vpop.f32.mrb[0].mxu0
  %1575 = vmatprep.mubr.f32.mxu0 0.0
  %1576 = vmatmul.mubr.f32.gmra.mrb[0].mxu0 %v1368
  %v1577 = vpop.f32.mrb[0].mxu0
  %v1578 = vadd.f32 %v1399, %v1577
  %v1579 = vpop.f32.mrb[0].mxu0
  %1580 = vmatprep.mubr.f32.mxu0 0.0
  %1581 = vmatmul.mubr.f32.gmra.mrb[0].mxu0 %v1369
  %v1582 = vpop.f32.mrb[0].mxu0
  %v1583 = vadd.f32 %v1399, %v1582
  %v1584 = vpop.f32.mrb[0].mxu0
  %1585 = vmatprep.mubr.f32.mxu0 0.0
  %1586 = vmatmul.mubr.f32.gmra.mrb[0].mxu0 %v1370
  %v1587 = vpop.f32.mrb[0].mxu0
  %v1588 = vadd.f32 %v1399, %v1587
  %v1589 = vpop.f32.mrb[0].mxu0
  %1590 = vmatprep.mubr.f32.mxu0 0.0
  %1591 = vmatmul.mubr.f32.gmra.mrb[0].mxu0 %v1371
  %v1592 = vpop.f32.mrb[0].mxu0
  %v1593 = vadd.f32 %v1399, %v1592
  %v1594 = vpop.f32.mrb[0].mxu0
  %1595 = vmatprep.mubr.f32.mxu0 0.0
  %1596 = vmatmul.mubr.f32.gmra.mrb[0].mxu0 %v1372
  %v1597 = vpop.f32.mrb[0].mxu0
  %v1598 = vadd.f32 %v1399, %v1597
  %v1599 = vpop.f32.mrb[0].mxu0
  %1600 = vmatprep.mubr.f32.mxu0 0.0
  %1601 = vmatmul.mubr.f32.gmra.mrb[0].mxu0 %v1373
  %v1602 = vpop.f32.mrb[0].mxu0
  %v1603 = vadd.f32 %v1399, %v1602
  %v1604 = vpop.f32.mrb[0].mxu0
  %1605 = vmatprep.mubr.f32.mxu0 0.0
  %1606 = vmatmul.mubr.f32.gmra.mrb[0].mxu0 %v1374
  %v1607 = vpop.f32.mrb[0].mxu0
  %v1608 = vadd.f32 %v1399, %v1607
  %v1609 = vpop.f32.mrb[0].mxu0
  %1610 = vmatprep.mubr.f32.mxu0 0.0
  %1611 = vmatmul.mubr.f32.gmra.mrb[0].mxu0 %v1375
  %v1612 = vpop.f32.mrb[0].mxu0
  %v1613 = vadd.f32 %v1399, %v1612
  %v1614 = vpop.f32.mrb[0].mxu0
  %1615 = vmatprep.mubr.f32.mxu0 0.0
  %1616 = vmatmul.mubr.f32.gmra.mrb[0].mxu0 %v1376
  %v1617 = vpop.f32.mrb[0].mxu0
  %v1618 = vadd.f32 %v1399, %v1617
  %v1619 = vpop.f32.mrb[0].mxu0
  %1620 = vmatprep.mubr.f32.mxu0 0.0
  %1621 = vmatmul.mubr.f32.gmra.mrb[0].mxu0 %v1377
  %v1622 = vpop.f32.mrb[0].mxu0
  %v1623 = vadd.f32 %v1399, %v1622
  %v1624 = vpop.f32.mrb[0].mxu0
  %1625 = vdwg.mxu0
  %1626 = vst [vmem:[%s5] sm:$0xff] %v1468
  %1627 = vst [vmem:[%s5 + $0x8] sm:$0xff] %v1473
  %1628 = vst [vmem:[%s5 + $0x10] sm:$0xff] %v1478
  %1629 = vst [vmem:[%s5 + $0x18] sm:$0xff] %v1483
  %1630 = vst [vmem:[%s5 + $0x20] sm:$0xff] %v1488
  %1631 = vst [vmem:[%s5 + $0x28] sm:$0xff] %v1493
  %1632 = vst [vmem:[%s5 + $0x30] sm:$0xff] %v1498
  %1633 = vst [vmem:[%s5 + $0x38] sm:$0xff] %v1503
  %1634 = vst [vmem:[%s5 + $0x40] sm:$0xff] %v1508
  %1635 = vst [vmem:[%s5 + $0x48] sm:$0xff] %v1513
  %1636 = vst [vmem:[%s5 + $0x50] sm:$0xff] %v1518
  %1637 = vst [vmem:[%s5 + $0x58] sm:$0xff] %v1523
  %1638 = vst [vmem:[%s5 + $0x60] sm:$0xff] %v1528
  %1639 = vst [vmem:[%s5 + $0x68] sm:$0xff] %v1533
  %1640 = vst [vmem:[%s5 + $0x70] sm:$0xff] %v1538
  %1641 = vst [vmem:[%s5 + $0x78] sm:$0xff] %v1543
  %1642 = vst [vmem:[%s5 + $0x80] sm:$0xff] %v1548
  %1643 = vst [vmem:[%s5 + $0x88] sm:$0xff] %v1553
  %1644 = vst [vmem:[%s5 + $0x90] sm:$0xff] %v1558
  %1645 = vst [vmem:[%s5 + $0x98] sm:$0xff] %v1563
  %1646 = vst [vmem:[%s5 + $0xa0] sm:$0xff] %v1568
  %1647 = vst [vmem:[%s5 + $0xa8] sm:$0xff] %v1573
  %1648 = vst [vmem:[%s5 + $0xb0] sm:$0xff] %v1578
  %1649 = vst [vmem:[%s5 + $0xb8] sm:$0xff] %v1583
  %1650 = vst [vmem:[%s5 + $0xc0] sm:$0xff] %v1588
  %1651 = vst [vmem:[%s5 + $0xc8] sm:$0xff] %v1593
  %1652 = vst [vmem:[%s5 + $0xd0] sm:$0xff] %v1598
  %1653 = vst [vmem:[%s5 + $0xd8] sm:$0xff] %v1603
  %1654 = vst [vmem:[%s5 + $0xe0] sm:$0xff] %v1608
  %1655 = vst [vmem:[%s5 + $0xe8] sm:$0xff] %v1613
  %1656 = vst [vmem:[%s5 + $0xf0] sm:$0xff] %v1618
  %1657 = vst [vmem:[%s5 + $0xf8] sm:$0xff] %v1623
  // Predicated region
  $region22: #{neural_net_forward.1} parent=0 // pred_check
    _
  $region23: #{neural_net_forward.1} parent=0 // pred_check_branch
    %1659 = sbr.rel (0) target = $region25
  $region24: #{neural_net_forward.1} parent=0 // pred_region
    _
  $region25: #{neural_net_forward.1} parent=0 // pred_fallthru
    _
  // Predicated region
  $region26: #{neural_net_forward.1} parent=0 // pred_check
    _
  $region27: #{neural_net_forward.1} parent=0 // pred_check_branch
    %1661 = sbr.rel (0) target = $region29
  $region28: #{neural_net_forward.1} parent=0 // pred_region
    _
  $region29: #{neural_net_forward.1} parent=0 // pred_fallthru
    _

</llo_original>
